<compile_context>
chip_gen: v7x
topology: tpu7x:2x2x1
jax: 0.10.0
libtpu: 0.0.40
codegen_flags: <defaults>
</compile_context>

<pallas_src>
import functools
import math

import jax
import jax.numpy as jnp
from jax.experimental import pallas as pl
from jax.experimental.pallas import tpu as pltpu


# ----------------------------------------------------------------------------
# Pallas kernel: fused Gaussian-MLP over a tile of `tm` coordinate rows.
# ----------------------------------------------------------------------------
def gauss_mlp_kernel(*refs, num_gauss_layers: int, tm: int, s: int,
                     coord_step: float):
    # refs = [w0, b0, w1, b1, ..., w_{L-1}, b_{L-1}, wf, bf, out]
    out_ref = refs[-1]
    prm = refs[:-1]

    # ---- coordinates generated in-kernel (no HBM coords input) --------------
    s_f = float(s)
    row0 = (pl.program_id(0) * tm).astype(jnp.float32)
    r = jax.lax.broadcasted_iota(jnp.int32, (tm, 1), 0).astype(jnp.float32) + row0
    # y index = r // s, x index = r % s, done in f32 (exact after correction;
    # avoids vector integer div/mod).
    yi = jnp.floor(r * (1.0 / s_f))
    xi = r - yi * s_f
    yi = jnp.where(xi < 0.0, yi - 1.0, jnp.where(xi >= s_f, yi + 1.0, yi))
    xi = jnp.where(xi < 0.0, xi + s_f, jnp.where(xi >= s_f, xi - s_f, xi))
    y = yi * coord_step - 1.0                                   # (tm, 1) in [-1, 1]
    x = xi * coord_step - 1.0                                   # (tm, 1) in [-1, 1]

    # ---- layer 0 on the VPU: K == 2 contraction as two broadcast FMAs -------
    # (scale already folded into w0/b0 by pack_gauss_params)
    w0 = prm[0][...]                                            # (2, Hp) f32
    b0 = prm[1][...]                                            # (1, Hp) f32
    z = y * w0[0:1, :] + x * w0[1:2, :] + b0                    # (tm, Hp)
    h = jnp.exp(-(z * z))

    # ---- hidden Gauss layers on the MXU (bf16 or f32 operands, f32 acc) -----
    for l in range(1, num_gauss_layers):
        w = prm[2 * l][...]
        b = prm[2 * l + 1][...]
        z = jnp.dot(h.astype(w.dtype), w, preferred_element_type=jnp.float32) + b
        h = jnp.exp(-(z * z))                                   # f32 exp (v5e-safe)

    # ---- final plain linear --------------------------------------------------
    wf = prm[-2][...]
    bf = prm[-1][...]
    out = jnp.dot(h.astype(wf.dtype), wf, preferred_element_type=jnp.float32) + bf
    # out_ch is tiny (3 lanes) -> masked store; output bytes are negligible.
    out_ref[...] = out.astype(out_ref.dtype)


# ----------------------------------------------------------------------------
# Parameter init (PyTorch-Linear-style) and packing.
# ----------------------------------------------------------------------------
def init_gauss_params(key, in_channels, out_channels, hidden_channels,
                      hidden_layers):
    """Uniform +-1/sqrt(fan_in) init.  Weights stored as (fan_in, fan_out) so
    the network computes x @ W + b (== PyTorch x @ W_torch.T + b).  Biases are
    stored as (1, fan_out)."""
    dims = [in_channels] + [hidden_channels] * (hidden_layers + 1) + [out_channels]
    params = []
    for fan_in, fan_out in zip(dims[:-1], dims[1:]):
        key, kw, kb = jax.random.split(key, 3)
        bound = 1.0 / math.sqrt(fan_in)
        w = jax.random.uniform(kw, (fan_in, fan_out), jnp.float32, -bound, bound)
        b = jax.random.uniform(kb, (1, fan_out), jnp.float32, -bound, bound)
        params.append((w, b))
    return params


def pack_gauss_params(params, *, scale, compute_dtype=jnp.bfloat16, lane=128):
    """Folds `scale` into the Gauss-layer weights/biases, zero-pads the hidden
    width to a lane multiple, and casts the MXU operands to `compute_dtype`.

    Correctness of the padding: padded channels get z == 0 -> exp(0) == 1, and
    the corresponding rows of every subsequent weight (and bias entries) are
    exactly zero, so the real outputs are unchanged.
    """
    num_layers = len(params)
    hidden = params[0][0].shape[1]
    hp = max(lane, ((hidden + lane - 1) // lane) * lane)
    packed = []
    for i, (w, b) in enumerate(params):
        fan_in, fan_out = w.shape
        w = w.astype(jnp.float32)
        b = b.reshape(1, fan_out).astype(jnp.float32)
        if i < num_layers - 1:                      # Gauss layer: fold scale
            w = w * scale
            b = b * scale
        pad_in = 0 if i == 0 else hp - fan_in       # layer 0 keeps fan_in == 2
        pad_out = (hp - fan_out) if i < num_layers - 1 else 0
        w = jnp.pad(w, ((0, pad_in), (0, pad_out)))
        b = jnp.pad(b, ((0, 0), (0, pad_out)))
        if i > 0:
            w = w.astype(compute_dtype)             # MXU operand dtype
        # layer-0 params and all biases stay f32 (VPU path / f32 accumulation).
        packed.append((w, b))
    return packed, hp


def create_coords(size: int) -> jnp.ndarray:
    """(size*size, 2) coordinate grid in [-1, 1], meshgrid 'ij' order."""
    lin = jnp.linspace(-1.0, 1.0, size, dtype=jnp.float32)
    yy, xx = jnp.meshgrid(lin, lin, indexing="ij")
    return jnp.stack([yy, xx], axis=-1).reshape(size * size, 2)


def _round_up(a: int, m: int) -> int:
    return ((a + m - 1) // m) * m


# ----------------------------------------------------------------------------
# Wrapper: pallas_call plumbing.
# ----------------------------------------------------------------------------
def gauss_forward(x_nchw, params, *, scale: float = 30.0, tile_rows: int = 2048,
                  compute_dtype=jnp.bfloat16):
    """Pallas implementation of GAUSS.forward.

    x_nchw is used only for its spatial size (like the PyTorch module).
    Returns (s*s, out_channels) float32.
    """
    s = x_nchw.shape[2]
    in_ch = params[0][0].shape[0]
    assert in_ch == 2, "GAUSS operates on 2-D image coordinates"
    out_ch = params[-1][0].shape[1]
    num_gauss_layers = len(params) - 1
    n_rows = s * s

    packed, hp = pack_gauss_params(params, scale=scale, compute_dtype=compute_dtype)

    # Big tiles amortize the ~0.35us/step grid overhead, but keep >= 2 grid
    # steps when possible so v7x's two TensorCores both get work.
    tm = max(8, min(tile_rows, _round_up(max(n_rows // 2, 1), 8)))
    n_pad = _round_up(n_rows, tm)
    grid = (n_pad // tm,)

    flat = []
    for w, b in packed:
        flat += [w, b]

    # Constant index_maps: each weight/bias block is DMA'd once and re-used
    # across grid steps by the pipeline (no per-step weight DMA).
    in_specs = [pl.BlockSpec(p.shape, lambda i: (0, 0)) for p in flat]

    coord_step = (2.0 / (s - 1)) if s > 1 else 0.0
    kernel = functools.partial(
        gauss_mlp_kernel,
        num_gauss_layers=num_gauss_layers, tm=tm, s=s, coord_step=coord_step,
    )

    # Advisory cost estimate so XLA schedules around the (compute-bound) call.
    flops = 2 * n_pad * (2 * hp + (num_gauss_layers - 1) * hp * hp + hp * out_ch)
    transcendentals = n_pad * hp * num_gauss_layers
    param_bytes = sum(int(p.size) * jnp.dtype(p.dtype).itemsize for p in flat)
    bytes_accessed = n_pad * out_ch * 4 + param_bytes

    out = pl.pallas_call(
        kernel,
        out_shape=jax.ShapeDtypeStruct((n_pad, out_ch), jnp.float32),
        grid_spec=pltpu.PrefetchScalarGridSpec(
            num_scalar_prefetch=0,
            grid=grid,
            in_specs=in_specs,
            out_specs=pl.BlockSpec((tm, out_ch), lambda i: (i, 0)),
        ),
        compiler_params=pltpu.CompilerParams(
            dimension_semantics=("parallel",),
        ),
        cost_estimate=pl.CostEstimate(
            flops=flops, transcendentals=transcendentals,
            bytes_accessed=bytes_accessed,
        ),
    )(*flat)

    return out[:n_rows]


# ----------------------------------------------------------------------------
# Pure-JAX references.
# ----------------------------------------------------------------------------
def gauss_forward_ref(x_nchw, params, *, scale: float = 30.0):
    """Spec reference: f32, unpadded, exactly the PyTorch module's math."""
    s = x_nchw.shape[2]
    h = create_coords(s)
    for w, b in params[:-1]:
        z = scale * (h @ w + b)
        h = jnp.exp(-(z * z))
    wf, bf = params[-1]
    return h @ wf + bf


def gauss_forward_packed_ref(s, packed):
    """Reference that mirrors the kernel's packed (padded / scale-folded /
    reduced-precision-operand) computation — used to validate the bf16 path."""
    coords = create_coords(s)
    y, x = coords[:, 0:1], coords[:, 1:2]
    w0, b0 = packed[0]
    z = y * w0[0:1, :] + x * w0[1:2, :] + b0
    h = jnp.exp(-(z * z))
    for w, b in packed[1:-1]:
        z = jnp.dot(h.astype(w.dtype), w, preferred_element_type=jnp.float32) + b
        h = jnp.exp(-(z * z))
    wf, bf = packed[-1]
    return jnp.dot(h.astype(wf.dtype), wf, preferred_element_type=jnp.float32) + bf


if __name__ == "__main__":
    key = jax.random.PRNGKey(0)

    # Module config (small INR over image coordinates).
    in_channels = 2          # coordinate dimensionality
    out_channels = 3
    hidden_channels = 32
    hidden_layers = 2
    scale = 30.0

    # Input image used only for its spatial size (NCHW).
    kx, kp = jax.random.split(key)
    x = jax.random.normal(kx, (2, 3, 16, 16), jnp.float32)
    params = init_gauss_params(kp, in_channels, out_channels,
                               hidden_channels, hidden_layers)
    s = x.shape[2]

    ref_f32 = gauss_forward_ref(x, params, scale=scale)

    # f32-operand path: checked tightly against the spec reference.
    out_f32 = jax.block_until_ready(
        gauss_forward(x, params, scale=scale, compute_dtype=jnp.float32))
    assert out_f32.shape == (s * s, out_channels), out_f32.shape
    assert jnp.allclose(out_f32, ref_f32, atol=1e-3, rtol=1e-3), \
        "f32 kernel mismatch vs spec reference"

    # bf16-operand path (v6e/v7x MXU fast path): checked against a reference
    # that applies the identical packing / casts.
    out_bf16 = jax.block_until_ready(
        gauss_forward(x, params, scale=scale, compute_dtype=jnp.bfloat16))
    packed_bf16, _ = pack_gauss_params(params, scale=scale,
                                       compute_dtype=jnp.bfloat16)
    ref_bf16 = gauss_forward_packed_ref(s, packed_bf16)
    assert out_bf16.shape == (s * s, out_channels), out_bf16.shape
    assert jnp.allclose(out_bf16, ref_bf16, atol=5e-3, rtol=5e-3), \
        "bf16 kernel mismatch vs matched-precision reference"

    print("KERNEL_OK")
</pallas_src>

<mosaic_0001>
module attributes {stable_mosaic.version = 11 : i64} {
  func.func @gauss_mlp_kernel(%arg0: i32, %arg1: memref<2x128xf32, #tpu.memory_space<vmem>>, %arg2: memref<1x128xf32, #tpu.memory_space<vmem>>, %arg3: memref<128x128xf32, #tpu.memory_space<vmem>>, %arg4: memref<1x128xf32, #tpu.memory_space<vmem>>, %arg5: memref<128x128xf32, #tpu.memory_space<vmem>>, %arg6: memref<1x128xf32, #tpu.memory_space<vmem>>, %arg7: memref<128x3xf32, #tpu.memory_space<vmem>>, %arg8: memref<1x3xf32, #tpu.memory_space<vmem>>, %arg9: memref<128x3xf32, #tpu.memory_space<vmem>>) attributes {dimension_semantics = [#tpu.dimension_semantics<parallel>], iteration_bounds = array<i64: 2>, scalar_prefetch = 0 : i64, scratch_operands = 0 : i64, tpu.core_type = #tpu.core_type<tc>, window_params = [{pipeline_mode = #tpu.pipeline_mode<synchronous>, transform_indices = @transform_0, window_bounds = array<i64: 2, 128>}, {pipeline_mode = #tpu.pipeline_mode<synchronous>, transform_indices = @transform_1, window_bounds = array<i64: 1, 128>}, {pipeline_mode = #tpu.pipeline_mode<synchronous>, transform_indices = @transform_2, window_bounds = array<i64: 128, 128>}, {pipeline_mode = #tpu.pipeline_mode<synchronous>, transform_indices = @transform_3, window_bounds = array<i64: 1, 128>}, {pipeline_mode = #tpu.pipeline_mode<synchronous>, transform_indices = @transform_4, window_bounds = array<i64: 128, 128>}, {pipeline_mode = #tpu.pipeline_mode<synchronous>, transform_indices = @transform_5, window_bounds = array<i64: 1, 128>}, {pipeline_mode = #tpu.pipeline_mode<synchronous>, transform_indices = @transform_6, window_bounds = array<i64: 128, 3>}, {pipeline_mode = #tpu.pipeline_mode<synchronous>, transform_indices = @transform_7, window_bounds = array<i64: 1, 3>}, {transform_indices = @transform_8, window_bounds = array<i64: 128, 3>}]} {
    %c128_i32 = arith.constant 128 : i32
    %0 = arith.muli %arg0, %c128_i32 : i32
    %1 = arith.sitofp %0 : i32 to f32
    %2 = tpu.iota {dimensions = array<i32: 0>} : vector<128x1xi32>
    %3 = arith.sitofp %2 : vector<128x1xi32> to vector<128x1xf32>
    %4 = vector.broadcast %1 : f32 to vector<128x1xf32>
    %5 = arith.addf %3, %4 : vector<128x1xf32>
    %cst = arith.constant 6.250000e-02 : f32
    %6 = vector.broadcast %cst : f32 to vector<128x1xf32>
    %7 = arith.mulf %5, %6 : vector<128x1xf32>
    %8 = math.floor %7 : vector<128x1xf32>
    %cst_0 = arith.constant 1.600000e+01 : f32
    %9 = vector.broadcast %cst_0 : f32 to vector<128x1xf32>
    %10 = arith.mulf %8, %9 : vector<128x1xf32>
    %11 = arith.subf %5, %10 : vector<128x1xf32>
    %cst_1 = arith.constant 0.000000e+00 : f32
    %12 = vector.broadcast %cst_1 : f32 to vector<128x1xf32>
    %13 = arith.cmpf olt, %11, %12 : vector<128x1xf32>
    %cst_2 = arith.constant 1.000000e+00 : f32
    %14 = vector.broadcast %cst_2 : f32 to vector<128x1xf32>
    %15 = arith.subf %8, %14 : vector<128x1xf32>
    %cst_3 = arith.constant 1.600000e+01 : f32
    %16 = vector.broadcast %cst_3 : f32 to vector<128x1xf32>
    %17 = arith.cmpf oge, %11, %16 : vector<128x1xf32>
    %cst_4 = arith.constant 1.000000e+00 : f32
    %18 = vector.broadcast %cst_4 : f32 to vector<128x1xf32>
    %19 = arith.addf %8, %18 : vector<128x1xf32>
    %20 = arith.select %17, %19, %8 : vector<128x1xi1>, vector<128x1xf32>
    %21 = arith.select %13, %15, %20 : vector<128x1xi1>, vector<128x1xf32>
    %cst_5 = arith.constant 0.000000e+00 : f32
    %22 = vector.broadcast %cst_5 : f32 to vector<128x1xf32>
    %23 = arith.cmpf olt, %11, %22 : vector<128x1xf32>
    %cst_6 = arith.constant 1.600000e+01 : f32
    %24 = vector.broadcast %cst_6 : f32 to vector<128x1xf32>
    %25 = arith.addf %11, %24 : vector<128x1xf32>
    %cst_7 = arith.constant 1.600000e+01 : f32
    %26 = vector.broadcast %cst_7 : f32 to vector<128x1xf32>
    %27 = arith.cmpf oge, %11, %26 : vector<128x1xf32>
    %cst_8 = arith.constant 1.600000e+01 : f32
    %28 = vector.broadcast %cst_8 : f32 to vector<128x1xf32>
    %29 = arith.subf %11, %28 : vector<128x1xf32>
    %30 = arith.select %27, %29, %11 : vector<128x1xi1>, vector<128x1xf32>
    %31 = arith.select %23, %25, %30 : vector<128x1xi1>, vector<128x1xf32>
    %cst_9 = arith.constant 0.13333334 : f32
    %32 = vector.broadcast %cst_9 : f32 to vector<128x1xf32>
    %33 = arith.mulf %21, %32 : vector<128x1xf32>
    %cst_10 = arith.constant 1.000000e+00 : f32
    %34 = vector.broadcast %cst_10 : f32 to vector<128x1xf32>
    %35 = arith.subf %33, %34 : vector<128x1xf32>
    %cst_11 = arith.constant 0.13333334 : f32
    %36 = vector.broadcast %cst_11 : f32 to vector<128x1xf32>
    %37 = arith.mulf %31, %36 : vector<128x1xf32>
    %cst_12 = arith.constant 1.000000e+00 : f32
    %38 = vector.broadcast %cst_12 : f32 to vector<128x1xf32>
    %39 = arith.subf %37, %38 : vector<128x1xf32>
    %c0 = arith.constant 0 : index
    %c0_13 = arith.constant 0 : index
    %40 = vector.load %arg1[%c0, %c0_13] : memref<2x128xf32, #tpu.memory_space<vmem>>, vector<2x128xf32>
    %c0_14 = arith.constant 0 : index
    %c0_15 = arith.constant 0 : index
    %41 = vector.load %arg2[%c0_14, %c0_15] : memref<1x128xf32, #tpu.memory_space<vmem>>, vector<1x128xf32>
    %42 = vector.extract_strided_slice %40 {offsets = [0, 0], sizes = [1, 128], strides = [1, 1]} : vector<2x128xf32> to vector<1x128xf32>
    %43 = vector.broadcast %35 : vector<128x1xf32> to vector<128x128xf32>
    %44 = vector.broadcast %42 : vector<1x128xf32> to vector<128x128xf32>
    %45 = arith.mulf %43, %44 : vector<128x128xf32>
    %46 = vector.extract_strided_slice %40 {offsets = [1, 0], sizes = [1, 128], strides = [1, 1]} : vector<2x128xf32> to vector<1x128xf32>
    %47 = vector.broadcast %39 : vector<128x1xf32> to vector<128x128xf32>
    %48 = vector.broadcast %46 : vector<1x128xf32> to vector<128x128xf32>
    %49 = arith.mulf %47, %48 : vector<128x128xf32>
    %50 = arith.addf %45, %49 : vector<128x128xf32>
    %51 = vector.broadcast %41 : vector<1x128xf32> to vector<128x128xf32>
    %52 = arith.addf %50, %51 : vector<128x128xf32>
    %53 = arith.mulf %52, %52 : vector<128x128xf32>
    %cst_16 = arith.constant 0.000000e+00 : f32
    %54 = vector.broadcast %cst_16 : f32 to vector<128x128xf32>
    %55 = arith.subf %54, %53 : vector<128x128xf32>
    %56 = math.exp %55 : vector<128x128xf32>
    %c0_17 = arith.constant 0 : index
    %c0_18 = arith.constant 0 : index
    %57 = vector.load %arg3[%c0_17, %c0_18] : memref<128x128xf32, #tpu.memory_space<vmem>>, vector<128x128xf32>
    %c0_19 = arith.constant 0 : index
    %c0_20 = arith.constant 0 : index
    %58 = vector.load %arg4[%c0_19, %c0_20] : memref<1x128xf32, #tpu.memory_space<vmem>>, vector<1x128xf32>
    %cst_21 = arith.constant dense<0.000000e+00> : vector<128x128xf32>
    %59 = tpu.matmul %56, %57, %cst_21 {dimension_numbers = #tpu.dot_dimension_numbers<[1], [0], [0], [1], [0, 0, 1, 1], [], []>} : vector<128x128xf32>, vector<128x128xf32>, vector<128x128xf32> -> vector<128x128xf32>
    %60 = vector.broadcast %58 : vector<1x128xf32> to vector<128x128xf32>
    %61 = arith.addf %59, %60 : vector<128x128xf32>
    %62 = arith.mulf %61, %61 : vector<128x128xf32>
    %cst_22 = arith.constant 0.000000e+00 : f32
    %63 = vector.broadcast %cst_22 : f32 to vector<128x128xf32>
    %64 = arith.subf %63, %62 : vector<128x128xf32>
    %65 = math.exp %64 : vector<128x128xf32>
    %c0_23 = arith.constant 0 : index
    %c0_24 = arith.constant 0 : index
    %66 = vector.load %arg5[%c0_23, %c0_24] : memref<128x128xf32, #tpu.memory_space<vmem>>, vector<128x128xf32>
    %c0_25 = arith.constant 0 : index
    %c0_26 = arith.constant 0 : index
    %67 = vector.load %arg6[%c0_25, %c0_26] : memref<1x128xf32, #tpu.memory_space<vmem>>, vector<1x128xf32>
    %cst_27 = arith.constant dense<0.000000e+00> : vector<128x128xf32>
    %68 = tpu.matmul %65, %66, %cst_27 {dimension_numbers = #tpu.dot_dimension_numbers<[1], [0], [0], [1], [0, 0, 1, 1], [], []>} : vector<128x128xf32>, vector<128x128xf32>, vector<128x128xf32> -> vector<128x128xf32>
    %69 = vector.broadcast %67 : vector<1x128xf32> to vector<128x128xf32>
    %70 = arith.addf %68, %69 : vector<128x128xf32>
    %71 = arith.mulf %70, %70 : vector<128x128xf32>
    %cst_28 = arith.constant 0.000000e+00 : f32
    %72 = vector.broadcast %cst_28 : f32 to vector<128x128xf32>
    %73 = arith.subf %72, %71 : vector<128x128xf32>
    %74 = math.exp %73 : vector<128x128xf32>
    %c0_29 = arith.constant 0 : index
    %c0_30 = arith.constant 0 : index
    %75 = vector.load %arg7[%c0_29, %c0_30] : memref<128x3xf32, #tpu.memory_space<vmem>>, vector<128x3xf32>
    %c0_31 = arith.constant 0 : index
    %c0_32 = arith.constant 0 : index
    %76 = vector.load %arg8[%c0_31, %c0_32] : memref<1x3xf32, #tpu.memory_space<vmem>>, vector<1x3xf32>
    %cst_33 = arith.constant dense<0.000000e+00> : vector<128x3xf32>
    %77 = tpu.matmul %74, %75, %cst_33 {dimension_numbers = #tpu.dot_dimension_numbers<[1], [0], [0], [1], [0, 0, 1, 1], [], []>} : vector<128x128xf32>, vector<128x3xf32>, vector<128x3xf32> -> vector<128x3xf32>
    %78 = vector.broadcast %76 : vector<1x3xf32> to vector<128x3xf32>
    %79 = arith.addf %77, %78 : vector<128x3xf32>
    %c0_34 = arith.constant 0 : index
    %c0_35 = arith.constant 0 : index
    %80 = vector.load %arg9[%c0_34, %c0_35] : memref<128x3xf32, #tpu.memory_space<vmem>>, vector<128x3xf32>
    tpu.vector_store %arg9[%c0_34, %c0_35], %79 {strides = array<i32>} : memref<128x3xf32, #tpu.memory_space<vmem>>, vector<128x3xf32>,
    return
  }
  func.func @transform_0(%arg0: i32) -> (i32, i32) {
    %c0_i32 = arith.constant 0 : i32
    %c0_i32_0 = arith.constant 0 : i32
    %c0_i32_1 = arith.constant 0 : i32
    return %c0_i32, %c0_i32_0 : i32, i32
  }
  func.func @transform_1(%arg0: i32) -> (i32, i32) {
    %c0_i32 = arith.constant 0 : i32
    %c0_i32_0 = arith.constant 0 : i32
    %c0_i32_1 = arith.constant 0 : i32
    return %c0_i32, %c0_i32_0 : i32, i32
  }
  func.func @transform_2(%arg0: i32) -> (i32, i32) {
    %c0_i32 = arith.constant 0 : i32
    %c0_i32_0 = arith.constant 0 : i32
    %c0_i32_1 = arith.constant 0 : i32
    return %c0_i32, %c0_i32_0 : i32, i32
  }
  func.func @transform_3(%arg0: i32) -> (i32, i32) {
    %c0_i32 = arith.constant 0 : i32
    %c0_i32_0 = arith.constant 0 : i32
    %c0_i32_1 = arith.constant 0 : i32
    return %c0_i32, %c0_i32_0 : i32, i32
  }
  func.func @transform_4(%arg0: i32) -> (i32, i32) {
    %c0_i32 = arith.constant 0 : i32
    %c0_i32_0 = arith.constant 0 : i32
    %c0_i32_1 = arith.constant 0 : i32
    return %c0_i32, %c0_i32_0 : i32, i32
  }
  func.func @transform_5(%arg0: i32) -> (i32, i32) {
    %c0_i32 = arith.constant 0 : i32
    %c0_i32_0 = arith.constant 0 : i32
    %c0_i32_1 = arith.constant 0 : i32
    return %c0_i32, %c0_i32_0 : i32, i32
  }
  func.func @transform_6(%arg0: i32) -> (i32, i32) {
    %c0_i32 = arith.constant 0 : i32
    %c0_i32_0 = arith.constant 0 : i32
    %c0_i32_1 = arith.constant 0 : i32
    return %c0_i32, %c0_i32_0 : i32, i32
  }
  func.func @transform_7(%arg0: i32) -> (i32, i32) {
    %c0_i32 = arith.constant 0 : i32
    %c0_i32_0 = arith.constant 0 : i32
    %c0_i32_1 = arith.constant 0 : i32
    return %c0_i32, %c0_i32_0 : i32, i32
  }
  func.func @transform_8(%arg0: i32) -> (i32, i32) {
    %c0_i32 = arith.constant 0 : i32
    %c0_i32_0 = arith.constant 0 : i32
    return %arg0, %c0_i32 : i32, i32
  }
}

</mosaic_0001>

<llo_original>
// kernel: tpu_custom_call.1
$region0: #{tpu_custom_call.1}
  #allocation0 [shape = 'u32[]', space=smem, size = 0x4, offset = 0x4, fixed_abs, tag = 'smem constant byte address 0x4 - core index']
  #allocation1 [shape = 'u32[144,128]{1,0:T(1,128)}', space=vmem, size = 0x12000, scoped, tag = 'internal scratch']
  %s0 = inlined_call_operand.vmem [shape: f32[2,128], index: 0, kind: input, shape index: {}]
  %s1 = inlined_call_operand.vmem [shape: f32[1,128], index: 1, kind: input, shape index: {}]
  %s2 = inlined_call_operand.vmem [shape: f32[128,128], index: 2, kind: input, shape index: {}]
  %s3 = inlined_call_operand.vmem [shape: f32[1,128], index: 3, kind: input, shape index: {}]
  %s4 = inlined_call_operand.hbm [shape: f32[128,128], index: 4, kind: input, shape index: {}]
  %s5 = inlined_call_operand.vmem [shape: f32[1,128], index: 5, kind: input, shape index: {}]
  %s6 = inlined_call_operand.vmem [shape: f32[128,3], index: 6, kind: input, shape index: {}]
  %s7 = inlined_call_operand.vmem [shape: f32[1,3], index: 7, kind: input, shape index: {}]
  %s8 = inlined_call_operand.vmem [shape: f32[256,3], index: 8, kind: output, shape index: {}]
  %s9 = sld [smem:[#allocation0]]
  $region69: #{tpu_custom_call.1} parent=0
    _
  %s11 = ssub.s32 1, %s9
  %s12 = scalar_select 0, %s11, %s9
  $region1: #{tpu_custom_call.1} parent=0
    #allocation2 [shape = 'u8[65536]{0}', space=vmem, size = 0x10000, scoped, tag = 'input window, operand 4, single buffered']
    #allocation3 [shape = 's32[2]{0}', space=sflag, size = 0x8, scoped, tag = 'scoped memory for tpu_custom_call.1']
    %13 = vsyncpa [#allocation3], 0
    loop: start=0, step=1, limit=4
    $region2: #{tpu_custom_call.1} parent=1 // loop_pre_header
      _
    $region3: #{tpu_custom_call.1} parent=1 // loop_header
      %s15 = sphi 0, %s19
      %p16 = scmp.ge.s32.totalorder %s15, 4
      %s23 = sphi 0, %s23
      %s25 = sphi 0, %s23
      %s26 = sphi 0, %s25
      %s40 = sphi 0, %s26
      %s44 = sphi 0, %s44
      %s46 = sphi 0, %s44
      %s47 = sphi 0, %s46
      %s61 = sphi 0, %s47
      %s65 = sphi 0, %s65
      %s67 = sphi 0, %s65
      %s68 = sphi 0, %s67
      %s82 = sphi 0, %s68
      %s86 = sphi 0, %s86
      %s88 = sphi 0, %s86
      %s89 = sphi 0, %s88
      %s103 = sphi 0, %s89
      %s107 = sphi 0, %s107
      %s109 = sphi 0, %s107
      %s110 = sphi 0, %s109
      %s124 = sphi 0, %s110
      %s128 = sphi 0, %s128
      %s130 = sphi 0, %s128
      %s131 = sphi 0, %s130
      %s145 = sphi 0, %s131
      %s149 = sphi 0, %s149
      %s151 = sphi 0, %s149
      %s152 = sphi 0, %s151
      %s166 = sphi 0, %s152
      %s170 = sphi 0, %s170
      %s172 = sphi 0, %s170
      %s173 = sphi 0, %s172
      %s187 = sphi 0, %s173
      %s193 = sphi 0, %s195
      %s196 = sphi 0, %s193
      %s197 = sphi 0, %s196
      %s213 = sphi 0, %s197
    $region4: #{tpu_custom_call.1} parent=1 // loop_header_branch
      %18 = sbr.rel (%p16) target = $region8
    $region5: #{tpu_custom_call.1} parent=1 // loop_body
      %s20 = ssub.s32 %s15, 1
      %s21 = ssub.s32 %s15, 2
      %s22 = sadd.s32 %s15, 1
      %s24 = sadd.s32 %s23, 1
      %p27 = scmp.eq.s32.totalorder %s15, 1
      %p28 = scmp.ne.s32.totalorder %s23, %s25
      %p29 = scmp.eq.s32.totalorder %s15, 0
      %p30 = por %p28, %p29
      %p31 = scmp.ne.s32.totalorder %s23, %s25
      %p32 = scmp.eq.s32.totalorder %s20, 1
      %p33 = por %p31, %p32
      %p34 = scmp.ne.s32.totalorder %s25, %s26
      %p35 = scmp.eq.s32.totalorder %s20, 0
      %p36 = por %p34, %p35
      %p37 = scmp.ne.s32.totalorder %s25, %s26
      %p38 = scmp.eq.s32.totalorder %s21, 1
      %p39 = por %p37, %p38
      %p41 = scmp.ne.s32.totalorder %s26, %s40
      %p42 = scmp.eq.s32.totalorder %s21, 0
      %p43 = por %p41, %p42
      %s45 = sadd.s32 %s44, 1
      %p48 = scmp.eq.s32.totalorder %s15, 1
      %p49 = scmp.ne.s32.totalorder %s44, %s46
      %p50 = scmp.eq.s32.totalorder %s15, 0
      %p51 = por %p49, %p50
      %p52 = scmp.ne.s32.totalorder %s44, %s46
      %p53 = scmp.eq.s32.totalorder %s20, 1
      %p54 = por %p52, %p53
      %p55 = scmp.ne.s32.totalorder %s46, %s47
      %p56 = scmp.eq.s32.totalorder %s20, 0
      %p57 = por %p55, %p56
      %p58 = scmp.ne.s32.totalorder %s46, %s47
      %p59 = scmp.eq.s32.totalorder %s21, 1
      %p60 = por %p58, %p59
      %p62 = scmp.ne.s32.totalorder %s47, %s61
      %p63 = scmp.eq.s32.totalorder %s21, 0
      %p64 = por %p62, %p63
      %s66 = sadd.s32 %s65, 1
      %p69 = scmp.eq.s32.totalorder %s15, 1
      %p70 = scmp.ne.s32.totalorder %s65, %s67
      %p71 = scmp.eq.s32.totalorder %s15, 0
      %p72 = por %p70, %p71
      %p73 = scmp.ne.s32.totalorder %s65, %s67
      %p74 = scmp.eq.s32.totalorder %s20, 1
      %p75 = por %p73, %p74
      %p76 = scmp.ne.s32.totalorder %s67, %s68
      %p77 = scmp.eq.s32.totalorder %s20, 0
      %p78 = por %p76, %p77
      %p79 = scmp.ne.s32.totalorder %s67, %s68
      %p80 = scmp.eq.s32.totalorder %s21, 1
      %p81 = por %p79, %p80
      %p83 = scmp.ne.s32.totalorder %s68, %s82
      %p84 = scmp.eq.s32.totalorder %s21, 0
      %p85 = por %p83, %p84
      %s87 = sadd.s32 %s86, 1
      %p90 = scmp.eq.s32.totalorder %s15, 1
      %p91 = scmp.ne.s32.totalorder %s86, %s88
      %p92 = scmp.eq.s32.totalorder %s15, 0
      %p93 = por %p91, %p92
      %p94 = scmp.ne.s32.totalorder %s86, %s88
      %p95 = scmp.eq.s32.totalorder %s20, 1
      %p96 = por %p94, %p95
      %p97 = scmp.ne.s32.totalorder %s88, %s89
      %p98 = scmp.eq.s32.totalorder %s20, 0
      %p99 = por %p97, %p98
      %p100 = scmp.ne.s32.totalorder %s88, %s89
      %p101 = scmp.eq.s32.totalorder %s21, 1
      %p102 = por %p100, %p101
      %p104 = scmp.ne.s32.totalorder %s89, %s103
      %p105 = scmp.eq.s32.totalorder %s21, 0
      %p106 = por %p104, %p105
      %s108 = sadd.s32 %s107, 1
      %p111 = scmp.eq.s32.totalorder %s15, 1
      %p112 = scmp.ne.s32.totalorder %s107, %s109
      %p113 = scmp.eq.s32.totalorder %s15, 0
      %p114 = por %p112, %p113
      %p115 = scmp.ne.s32.totalorder %s107, %s109
      %p116 = scmp.eq.s32.totalorder %s20, 1
      %p117 = por %p115, %p116
      %p118 = scmp.ne.s32.totalorder %s109, %s110
      %p119 = scmp.eq.s32.totalorder %s20, 0
      %p120 = por %p118, %p119
      %p121 = scmp.ne.s32.totalorder %s109, %s110
      %p122 = scmp.eq.s32.totalorder %s21, 1
      %p123 = por %p121, %p122
      %p125 = scmp.ne.s32.totalorder %s110, %s124
      %p126 = scmp.eq.s32.totalorder %s21, 0
      %p127 = por %p125, %p126
      %s129 = sadd.s32 %s128, 1
      %p132 = scmp.eq.s32.totalorder %s15, 1
      %p133 = scmp.ne.s32.totalorder %s128, %s130
      %p134 = scmp.eq.s32.totalorder %s15, 0
      %p135 = por %p133, %p134
      %p136 = scmp.ne.s32.totalorder %s128, %s130
      %p137 = scmp.eq.s32.totalorder %s20, 1
      %p138 = por %p136, %p137
      %p139 = scmp.ne.s32.totalorder %s130, %s131
      %p140 = scmp.eq.s32.totalorder %s20, 0
      %p141 = por %p139, %p140
      %p142 = scmp.ne.s32.totalorder %s130, %s131
      %p143 = scmp.eq.s32.totalorder %s21, 1
      %p144 = por %p142, %p143
      %p146 = scmp.ne.s32.totalorder %s131, %s145
      %p147 = scmp.eq.s32.totalorder %s21, 0
      %p148 = por %p146, %p147
      %s150 = sadd.s32 %s149, 1
      %p153 = scmp.eq.s32.totalorder %s15, 1
      %p154 = scmp.ne.s32.totalorder %s149, %s151
      %p155 = scmp.eq.s32.totalorder %s15, 0
      %p156 = por %p154, %p155
      %p157 = scmp.ne.s32.totalorder %s149, %s151
      %p158 = scmp.eq.s32.totalorder %s20, 1
      %p159 = por %p157, %p158
      %p160 = scmp.ne.s32.totalorder %s151, %s152
      %p161 = scmp.eq.s32.totalorder %s20, 0
      %p162 = por %p160, %p161
      %p163 = scmp.ne.s32.totalorder %s151, %s152
      %p164 = scmp.eq.s32.totalorder %s21, 1
      %p165 = por %p163, %p164
      %p167 = scmp.ne.s32.totalorder %s152, %s166
      %p168 = scmp.eq.s32.totalorder %s21, 0
      %p169 = por %p167, %p168
      %s171 = sadd.s32 %s170, 1
      %p174 = scmp.eq.s32.totalorder %s15, 1
      %p175 = scmp.ne.s32.totalorder %s170, %s172
      %p176 = scmp.eq.s32.totalorder %s15, 0
      %p177 = por %p175, %p176
      %p178 = scmp.ne.s32.totalorder %s170, %s172
      %p179 = scmp.eq.s32.totalorder %s20, 1
      %p180 = por %p178, %p179
      %p181 = scmp.ne.s32.totalorder %s172, %s173
      %p182 = scmp.eq.s32.totalorder %s20, 0
      %p183 = por %p181, %p182
      %p184 = scmp.ne.s32.totalorder %s172, %s173
      %p185 = scmp.eq.s32.totalorder %s21, 1
      %p186 = por %p184, %p185
      %p188 = scmp.ne.s32.totalorder %s173, %s187
      %p189 = scmp.eq.s32.totalorder %s21, 0
      %p190 = por %p188, %p189
      %s191 = ssub.s32 %s15, %s22
      %p192 = scmp.eq.s32.totalorder %s191, 0
      %s194 = sadd.s32 %s193, 1
      %s195 = scalar_select %p192, %s193, %s194
      %p198 = pneg %p192
      %p199 = scmp.eq.s32.totalorder %s15, 1
      %p200 = por %p198, %p199
      %p201 = scmp.ne.s32.totalorder %s193, %s196
      %p202 = scmp.eq.s32.totalorder %s15, 0
      %p203 = por %p201, %p202
      %p204 = scmp.ne.s32.totalorder %s193, %s196
      %p205 = scmp.eq.s32.totalorder %s20, 1
      %p206 = por %p204, %p205
      %p207 = scmp.ne.s32.totalorder %s196, %s197
      %p208 = scmp.eq.s32.totalorder %s20, 0
      %p209 = por %p207, %p208
      %p210 = scmp.ne.s32.totalorder %s196, %s197
      %p211 = scmp.eq.s32.totalorder %s21, 1
      %p212 = por %p210, %p211
      %p214 = scmp.ne.s32.totalorder %s197, %s213
      %p215 = scmp.eq.s32.totalorder %s21, 0
      %p216 = por %p214, %p215
      %p217 = scmp.le.s32.totalorder 1, %s15
      %p218 = scmp.lt.s32.totalorder %s15, 3
      %p219 = pnand %p217, %p218
      %p220 = pneg %p219
      // Predicated region
      $region9: #{tpu_custom_call.1} parent=5 // pred_check
        _
      $region10: #{tpu_custom_call.1} parent=5 // pred_check_branch
        %222 = sbr.rel (%p219) target = $region12
      $region11: #{tpu_custom_call.1} parent=5 // pred_region
        %s223 = ssub.s32 %s15, 1
        // Predicated region
        $region13: #{tpu_custom_call.1} parent=11 // pred_check
          %p224 = pneg %p36
        $region14: #{tpu_custom_call.1} parent=11 // pred_check_branch
          %226 = sbr.rel (%p224) target = $region16
        $region15: #{tpu_custom_call.1} parent=11 // pred_region
          _
        $region16: #{tpu_custom_call.1} parent=11 // pred_fallthru
          _
        // Predicated region
        $region17: #{tpu_custom_call.1} parent=11 // pred_check
          %p227 = pneg %p57
        $region18: #{tpu_custom_call.1} parent=11 // pred_check_branch
          %229 = sbr.rel (%p227) target = $region20
        $region19: #{tpu_custom_call.1} parent=11 // pred_region
          _
        $region20: #{tpu_custom_call.1} parent=11 // pred_fallthru
          _
        // Predicated region
        $region21: #{tpu_custom_call.1} parent=11 // pred_check
          %p230 = pneg %p78
        $region22: #{tpu_custom_call.1} parent=11 // pred_check_branch
          %232 = sbr.rel (%p230) target = $region24
        $region23: #{tpu_custom_call.1} parent=11 // pred_region
          _
        $region24: #{tpu_custom_call.1} parent=11 // pred_fallthru
          _
        // Predicated region
        $region25: #{tpu_custom_call.1} parent=11 // pred_check
          %p233 = pneg %p99
        $region26: #{tpu_custom_call.1} parent=11 // pred_check_branch
          %235 = sbr.rel (%p233) target = $region28
        $region27: #{tpu_custom_call.1} parent=11 // pred_region
          _
        $region28: #{tpu_custom_call.1} parent=11 // pred_fallthru
          _
        // Predicated region
        $region29: #{tpu_custom_call.1} parent=11 // pred_check
          %p236 = pneg %p120
        $region30: #{tpu_custom_call.1} parent=11 // pred_check_branch
          %238 = sbr.rel (%p236) target = $region32
        $region31: #{tpu_custom_call.1} parent=11 // pred_region
          %s240 = ssub.s32 2048, 2048
          %241 = vsyncadd [#allocation3], %s240
          %s242 = sshll.u32 [#allocation2], 4
          %s243 = int_to_ptr.vmem [resolvable:$true] %s242
          %248 = dma.hbm_to_vmem [thread:$0]  %s4, 2048, %s243, [#allocation3], 128, 128, 8
        $region32: #{tpu_custom_call.1} parent=11 // pred_fallthru
          _
        // Predicated region
        $region33: #{tpu_custom_call.1} parent=11 // pred_check
          %p249 = pneg %p141
        $region34: #{tpu_custom_call.1} parent=11 // pred_check_branch
          %251 = sbr.rel (%p249) target = $region36
        $region35: #{tpu_custom_call.1} parent=11 // pred_region
          _
        $region36: #{tpu_custom_call.1} parent=11 // pred_fallthru
          _
        // Predicated region
        $region37: #{tpu_custom_call.1} parent=11 // pred_check
          %p252 = pneg %p162
        $region38: #{tpu_custom_call.1} parent=11 // pred_check_branch
          %254 = sbr.rel (%p252) target = $region40
        $region39: #{tpu_custom_call.1} parent=11 // pred_region
          _
        $region40: #{tpu_custom_call.1} parent=11 // pred_fallthru
          _
        // Predicated region
        $region41: #{tpu_custom_call.1} parent=11 // pred_check
          %p255 = pneg %p183
        $region42: #{tpu_custom_call.1} parent=11 // pred_check_branch
          %257 = sbr.rel (%p255) target = $region44
        $region43: #{tpu_custom_call.1} parent=11 // pred_region
          _
        $region44: #{tpu_custom_call.1} parent=11 // pred_fallthru
          _
      $region12: #{tpu_custom_call.1} parent=5 // pred_fallthru
        _
      %p258 = scmp.lt.s32.totalorder %s15, 2
      // Predicated region
      $region45: #{tpu_custom_call.1} parent=5 // pred_check
        %p259 = pneg %p258
      $region46: #{tpu_custom_call.1} parent=5 // pred_check_branch
        %261 = sbr.rel (%p259) target = $region48
      $region47: #{tpu_custom_call.1} parent=5 // pred_region
        _
      $region48: #{tpu_custom_call.1} parent=5 // pred_fallthru
        _
      %p262 = scmp.le.s32.totalorder 1, %s15
      %p263 = scmp.lt.s32.totalorder %s15, 3
      %p264 = pnand %p262, %p263
      %p265 = pneg %p264
      // Predicated region
      $region49: #{tpu_custom_call.1} parent=5 // pred_check
        _
      $region50: #{tpu_custom_call.1} parent=5 // pred_check_branch
        %267 = sbr.rel (%p264) target = $region52
      $region51: #{tpu_custom_call.1} parent=5 // pred_region
        %s268 = ssub.s32 %s15, 1
        // Predicated region
        $region53: #{tpu_custom_call.1} parent=51 // pred_check
          %p269 = pneg %p120
        $region54: #{tpu_custom_call.1} parent=51 // pred_check_branch
          %271 = sbr.rel (%p269) target = $region56
        $region55: #{tpu_custom_call.1} parent=51 // pred_region
          %272 = dma.done [#allocation3], 2048
        $region56: #{tpu_custom_call.1} parent=51 // pred_fallthru
          _
        %p273 = pneg %p36
        %p274 = pneg %p33
        %p275 = pneg %p57
        %p276 = pneg %p54
        %p277 = pneg %p78
        %p278 = pneg %p75
        %p279 = pneg %p99
        %p280 = pneg %p96
        %p281 = pneg %p120
        %p282 = pneg %p117
        %p283 = pneg %p141
        %p284 = pneg %p138
        %p285 = pneg %p162
        %p286 = pneg %p159
        %p287 = pneg %p183
        %p288 = pneg %p180
        %p289 = pneg %p209
        %p290 = pneg %p206
        %s291 = smul.u32 16, %s20
        %p292 = scmp.lt.s32.totalorder %s291, 31
        %s293 = scalar_select %p292, %s291, 31
        %s294 = smul.addr %s293, 8
        %s295 = scalar_lea.vmem %s8, %s294
        %s296 = smul.u32 16, %s20
        %p297 = scmp.lt.s32.totalorder %s296, 31
        %s298 = scalar_select %p297, %s296, 31
        %s299 = smul.addr %s298, 8
        %s300 = scalar_lea.vmem %s8, %s299
        %s301 = smul.u32 16, %s20
        %s302 = smul.u32 %s20, 128
        %s303 = scvt.s32.f32 %s302
        %v304 = vlaneseq
        %v305 = vshrl.u32 %v304, 7
        %v306 = vadd.s32 %v305, 8
        %v307 = vadd.s32 %v305, 16
        %v308 = vadd.s32 %v305, 24
        %v309 = vadd.s32 %v305, 32
        %v310 = vadd.s32 %v305, 40
        %v311 = vadd.s32 %v305, 48
        %v312 = vadd.s32 %v305, 56
        %v313 = vadd.s32 %v305, 64
        %v314 = vadd.s32 %v305, 72
        %v315 = vadd.s32 %v305, 80
        %v316 = vadd.s32 %v305, 88
        %v317 = vadd.s32 %v305, 96
        %v318 = vadd.s32 %v305, 104
        %v319 = vadd.s32 %v305, 112
        %v320 = vadd.s32 %v305, 120
        %v321 = vcvt.s32.f32 %v305
        %v322 = vcvt.s32.f32 %v306
        %v323 = vcvt.s32.f32 %v307
        %v324 = vcvt.s32.f32 %v308
        %v325 = vcvt.s32.f32 %v309
        %v326 = vcvt.s32.f32 %v310
        %v327 = vcvt.s32.f32 %v311
        %v328 = vcvt.s32.f32 %v312
        %v329 = vcvt.s32.f32 %v313
        %v330 = vcvt.s32.f32 %v314
        %v331 = vcvt.s32.f32 %v315
        %v332 = vcvt.s32.f32 %v316
        %v333 = vcvt.s32.f32 %v317
        %v334 = vcvt.s32.f32 %v318
        %v335 = vcvt.s32.f32 %v319
        %v336 = vcvt.s32.f32 %v320
        %v337 = vstv %s303
        %v338 = vadd.f32 %v321, %v337
        %v339 = vadd.f32 %v322, %v337
        %v340 = vadd.f32 %v323, %v337
        %v341 = vadd.f32 %v324, %v337
        %v342 = vadd.f32 %v325, %v337
        %v343 = vadd.f32 %v326, %v337
        %v344 = vadd.f32 %v327, %v337
        %v345 = vadd.f32 %v328, %v337
        %v346 = vadd.f32 %v329, %v337
        %v347 = vadd.f32 %v330, %v337
        %v348 = vadd.f32 %v331, %v337
        %v349 = vadd.f32 %v332, %v337
        %v350 = vadd.f32 %v333, %v337
        %v351 = vadd.f32 %v334, %v337
        %v352 = vadd.f32 %v335, %v337
        %v353 = vadd.f32 %v336, %v337
        %v354 = vmul.f32 %v338, 0.0625
        %v355 = vmul.f32 %v339, 0.0625
        %v356 = vmul.f32 %v340, 0.0625
        %v357 = vmul.f32 %v341, 0.0625
        %v358 = vmul.f32 %v342, 0.0625
        %v359 = vmul.f32 %v343, 0.0625
        %v360 = vmul.f32 %v344, 0.0625
        %v361 = vmul.f32 %v345, 0.0625
        %v362 = vmul.f32 %v346, 0.0625
        %v363 = vmul.f32 %v347, 0.0625
        %v364 = vmul.f32 %v348, 0.0625
        %v365 = vmul.f32 %v349, 0.0625
        %v366 = vmul.f32 %v350, 0.0625
        %v367 = vmul.f32 %v351, 0.0625
        %v368 = vmul.f32 %v352, 0.0625
        %v369 = vmul.f32 %v353, 0.0625
        %v370 = vfloor.f32 %v354
        %v371 = vfloor.f32 %v355
        %v372 = vfloor.f32 %v356
        %v373 = vfloor.f32 %v357
        %v374 = vfloor.f32 %v358
        %v375 = vfloor.f32 %v359
        %v376 = vfloor.f32 %v360
        %v377 = vfloor.f32 %v361
        %v378 = vfloor.f32 %v362
        %v379 = vfloor.f32 %v363
        %v380 = vfloor.f32 %v364
        %v381 = vfloor.f32 %v365
        %v382 = vfloor.f32 %v366
        %v383 = vfloor.f32 %v367
        %v384 = vfloor.f32 %v368
        %v385 = vfloor.f32 %v369
        %v386 = vmul.f32 %v370, 16.0
        %v387 = vmul.f32 %v371, 16.0
        %v388 = vmul.f32 %v372, 16.0
        %v389 = vmul.f32 %v373, 16.0
        %v390 = vmul.f32 %v374, 16.0
        %v391 = vmul.f32 %v375, 16.0
        %v392 = vmul.f32 %v376, 16.0
        %v393 = vmul.f32 %v377, 16.0
        %v394 = vmul.f32 %v378, 16.0
        %v395 = vmul.f32 %v379, 16.0
        %v396 = vmul.f32 %v380, 16.0
        %v397 = vmul.f32 %v381, 16.0
        %v398 = vmul.f32 %v382, 16.0
        %v399 = vmul.f32 %v383, 16.0
        %v400 = vmul.f32 %v384, 16.0
        %v401 = vmul.f32 %v385, 16.0
        %v402 = vsub.f32 %v338, %v386
        %v403 = vsub.f32 %v339, %v387
        %v404 = vsub.f32 %v340, %v388
        %v405 = vsub.f32 %v341, %v389
        %v406 = vsub.f32 %v342, %v390
        %v407 = vsub.f32 %v343, %v391
        %v408 = vsub.f32 %v344, %v392
        %v409 = vsub.f32 %v345, %v393
        %v410 = vsub.f32 %v346, %v394
        %v411 = vsub.f32 %v347, %v395
        %v412 = vsub.f32 %v348, %v396
        %v413 = vsub.f32 %v349, %v397
        %v414 = vsub.f32 %v350, %v398
        %v415 = vsub.f32 %v351, %v399
        %v416 = vsub.f32 %v352, %v400
        %v417 = vsub.f32 %v353, %v401
        %vm418 = vcmp.lt.f32.partialorder %v402, 0.0
        %vm419 = vcmp.lt.f32.partialorder %v403, 0.0
        %vm420 = vcmp.lt.f32.partialorder %v404, 0.0
        %vm421 = vcmp.lt.f32.partialorder %v405, 0.0
        %vm422 = vcmp.lt.f32.partialorder %v406, 0.0
        %vm423 = vcmp.lt.f32.partialorder %v407, 0.0
        %vm424 = vcmp.lt.f32.partialorder %v408, 0.0
        %vm425 = vcmp.lt.f32.partialorder %v409, 0.0
        %vm426 = vcmp.lt.f32.partialorder %v410, 0.0
        %vm427 = vcmp.lt.f32.partialorder %v411, 0.0
        %vm428 = vcmp.lt.f32.partialorder %v412, 0.0
        %vm429 = vcmp.lt.f32.partialorder %v413, 0.0
        %vm430 = vcmp.lt.f32.partialorder %v414, 0.0
        %vm431 = vcmp.lt.f32.partialorder %v415, 0.0
        %vm432 = vcmp.lt.f32.partialorder %v416, 0.0
        %vm433 = vcmp.lt.f32.partialorder %v417, 0.0
        %v434 = vsub.f32 %v370, 1.0
        %v435 = vsub.f32 %v371, 1.0
        %v436 = vsub.f32 %v372, 1.0
        %v437 = vsub.f32 %v373, 1.0
        %v438 = vsub.f32 %v374, 1.0
        %v439 = vsub.f32 %v375, 1.0
        %v440 = vsub.f32 %v376, 1.0
        %v441 = vsub.f32 %v377, 1.0
        %v442 = vsub.f32 %v378, 1.0
        %v443 = vsub.f32 %v379, 1.0
        %v444 = vsub.f32 %v380, 1.0
        %v445 = vsub.f32 %v381, 1.0
        %v446 = vsub.f32 %v382, 1.0
        %v447 = vsub.f32 %v383, 1.0
        %v448 = vsub.f32 %v384, 1.0
        %v449 = vsub.f32 %v385, 1.0
        %vm450 = vcmp.ge.f32.partialorder %v402, 16.0
        %vm451 = vcmp.ge.f32.partialorder %v403, 16.0
        %vm452 = vcmp.ge.f32.partialorder %v404, 16.0
        %vm453 = vcmp.ge.f32.partialorder %v405, 16.0
        %vm454 = vcmp.ge.f32.partialorder %v406, 16.0
        %vm455 = vcmp.ge.f32.partialorder %v407, 16.0
        %vm456 = vcmp.ge.f32.partialorder %v408, 16.0
        %vm457 = vcmp.ge.f32.partialorder %v409, 16.0
        %vm458 = vcmp.ge.f32.partialorder %v410, 16.0
        %vm459 = vcmp.ge.f32.partialorder %v411, 16.0
        %vm460 = vcmp.ge.f32.partialorder %v412, 16.0
        %vm461 = vcmp.ge.f32.partialorder %v413, 16.0
        %vm462 = vcmp.ge.f32.partialorder %v414, 16.0
        %vm463 = vcmp.ge.f32.partialorder %v415, 16.0
        %vm464 = vcmp.ge.f32.partialorder %v416, 16.0
        %vm465 = vcmp.ge.f32.partialorder %v417, 16.0
        %v466 = vadd.f32 %v370, 1.0
        %v467 = vadd.f32 %v371, 1.0
        %v468 = vadd.f32 %v372, 1.0
        %v469 = vadd.f32 %v373, 1.0
        %v470 = vadd.f32 %v374, 1.0
        %v471 = vadd.f32 %v375, 1.0
        %v472 = vadd.f32 %v376, 1.0
        %v473 = vadd.f32 %v377, 1.0
        %v474 = vadd.f32 %v378, 1.0
        %v475 = vadd.f32 %v379, 1.0
        %v476 = vadd.f32 %v380, 1.0
        %v477 = vadd.f32 %v381, 1.0
        %v478 = vadd.f32 %v382, 1.0
        %v479 = vadd.f32 %v383, 1.0
        %v480 = vadd.f32 %v384, 1.0
        %v481 = vadd.f32 %v385, 1.0
        %v482 = vsel %vm450, %v466, %v370
        %v483 = vsel %vm451, %v467, %v371
        %v484 = vsel %vm452, %v468, %v372
        %v485 = vsel %vm453, %v469, %v373
        %v486 = vsel %vm454, %v470, %v374
        %v487 = vsel %vm455, %v471, %v375
        %v488 = vsel %vm456, %v472, %v376
        %v489 = vsel %vm457, %v473, %v377
        %v490 = vsel %vm458, %v474, %v378
        %v491 = vsel %vm459, %v475, %v379
        %v492 = vsel %vm460, %v476, %v380
        %v493 = vsel %vm461, %v477, %v381
        %v494 = vsel %vm462, %v478, %v382
        %v495 = vsel %vm463, %v479, %v383
        %v496 = vsel %vm464, %v480, %v384
        %v497 = vsel %vm465, %v481, %v385
        %v498 = vsel %vm418, %v434, %v482
        %v499 = vsel %vm419, %v435, %v483
        %v500 = vsel %vm420, %v436, %v484
        %v501 = vsel %vm421, %v437, %v485
        %v502 = vsel %vm422, %v438, %v486
        %v503 = vsel %vm423, %v439, %v487
        %v504 = vsel %vm424, %v440, %v488
        %v505 = vsel %vm425, %v441, %v489
        %v506 = vsel %vm426, %v442, %v490
        %v507 = vsel %vm427, %v443, %v491
        %v508 = vsel %vm428, %v444, %v492
        %v509 = vsel %vm429, %v445, %v493
        %v510 = vsel %vm430, %v446, %v494
        %v511 = vsel %vm431, %v447, %v495
        %v512 = vsel %vm432, %v448, %v496
        %v513 = vsel %vm433, %v449, %v497
        %v514 = vadd.f32 %v402, 16.0
        %v515 = vadd.f32 %v403, 16.0
        %v516 = vadd.f32 %v404, 16.0
        %v517 = vadd.f32 %v405, 16.0
        %v518 = vadd.f32 %v406, 16.0
        %v519 = vadd.f32 %v407, 16.0
        %v520 = vadd.f32 %v408, 16.0
        %v521 = vadd.f32 %v409, 16.0
        %v522 = vadd.f32 %v410, 16.0
        %v523 = vadd.f32 %v411, 16.0
        %v524 = vadd.f32 %v412, 16.0
        %v525 = vadd.f32 %v413, 16.0
        %v526 = vadd.f32 %v414, 16.0
        %v527 = vadd.f32 %v415, 16.0
        %v528 = vadd.f32 %v416, 16.0
        %v529 = vadd.f32 %v417, 16.0
        %v530 = vsub.f32 %v402, 16.0
        %v531 = vsub.f32 %v403, 16.0
        %v532 = vsub.f32 %v404, 16.0
        %v533 = vsub.f32 %v405, 16.0
        %v534 = vsub.f32 %v406, 16.0
        %v535 = vsub.f32 %v407, 16.0
        %v536 = vsub.f32 %v408, 16.0
        %v537 = vsub.f32 %v409, 16.0
        %v538 = vsub.f32 %v410, 16.0
        %v539 = vsub.f32 %v411, 16.0
        %v540 = vsub.f32 %v412, 16.0
        %v541 = vsub.f32 %v413, 16.0
        %v542 = vsub.f32 %v414, 16.0
        %v543 = vsub.f32 %v415, 16.0
        %v544 = vsub.f32 %v416, 16.0
        %v545 = vsub.f32 %v417, 16.0
        %v546 = vsel %vm450, %v530, %v402
        %v547 = vsel %vm451, %v531, %v403
        %v548 = vsel %vm452, %v532, %v404
        %v549 = vsel %vm453, %v533, %v405
        %v550 = vsel %vm454, %v534, %v406
        %v551 = vsel %vm455, %v535, %v407
        %v552 = vsel %vm456, %v536, %v408
        %v553 = vsel %vm457, %v537, %v409
        %v554 = vsel %vm458, %v538, %v410
        %v555 = vsel %vm459, %v539, %v411
        %v556 = vsel %vm460, %v540, %v412
        %v557 = vsel %vm461, %v541, %v413
        %v558 = vsel %vm462, %v542, %v414
        %v559 = vsel %vm463, %v543, %v415
        %v560 = vsel %vm464, %v544, %v416
        %v561 = vsel %vm465, %v545, %v417
        %v562 = vsel %vm418, %v514, %v546
        %v563 = vsel %vm419, %v515, %v547
        %v564 = vsel %vm420, %v516, %v548
        %v565 = vsel %vm421, %v517, %v549
        %v566 = vsel %vm422, %v518, %v550
        %v567 = vsel %vm423, %v519, %v551
        %v568 = vsel %vm424, %v520, %v552
        %v569 = vsel %vm425, %v521, %v553
        %v570 = vsel %vm426, %v522, %v554
        %v571 = vsel %vm427, %v523, %v555
        %v572 = vsel %vm428, %v524, %v556
        %v573 = vsel %vm429, %v525, %v557
        %v574 = vsel %vm430, %v526, %v558
        %v575 = vsel %vm431, %v527, %v559
        %v576 = vsel %vm432, %v528, %v560
        %v577 = vsel %vm433, %v529, %v561
        %v578 = vmul.f32 %v498, 0.13333334
        %v579 = vmul.f32 %v499, 0.13333334
        %v580 = vmul.f32 %v500, 0.13333334
        %v581 = vmul.f32 %v501, 0.13333334
        %v582 = vmul.f32 %v502, 0.13333334
        %v583 = vmul.f32 %v503, 0.13333334
        %v584 = vmul.f32 %v504, 0.13333334
        %v585 = vmul.f32 %v505, 0.13333334
        %v586 = vmul.f32 %v506, 0.13333334
        %v587 = vmul.f32 %v507, 0.13333334
        %v588 = vmul.f32 %v508, 0.13333334
        %v589 = vmul.f32 %v509, 0.13333334
        %v590 = vmul.f32 %v510, 0.13333334
        %v591 = vmul.f32 %v511, 0.13333334
        %v592 = vmul.f32 %v512, 0.13333334
        %v593 = vmul.f32 %v513, 0.13333334
        %v594 = vsub.f32 %v578, 1.0
        %v595 = vsub.f32 %v579, 1.0
        %v596 = vsub.f32 %v580, 1.0
        %v597 = vsub.f32 %v581, 1.0
        %v598 = vsub.f32 %v582, 1.0
        %v599 = vsub.f32 %v583, 1.0
        %v600 = vsub.f32 %v584, 1.0
        %v601 = vsub.f32 %v585, 1.0
        %v602 = vsub.f32 %v586, 1.0
        %v603 = vsub.f32 %v587, 1.0
        %v604 = vsub.f32 %v588, 1.0
        %v605 = vsub.f32 %v589, 1.0
        %v606 = vsub.f32 %v590, 1.0
        %v607 = vsub.f32 %v591, 1.0
        %v608 = vsub.f32 %v592, 1.0
        %v609 = vsub.f32 %v593, 1.0
        %v610 = vmul.f32 %v562, 0.13333334
        %v611 = vmul.f32 %v563, 0.13333334
        %v612 = vmul.f32 %v564, 0.13333334
        %v613 = vmul.f32 %v565, 0.13333334
        %v614 = vmul.f32 %v566, 0.13333334
        %v615 = vmul.f32 %v567, 0.13333334
        %v616 = vmul.f32 %v568, 0.13333334
        %v617 = vmul.f32 %v569, 0.13333334
        %v618 = vmul.f32 %v570, 0.13333334
        %v619 = vmul.f32 %v571, 0.13333334
        %v620 = vmul.f32 %v572, 0.13333334
        %v621 = vmul.f32 %v573, 0.13333334
        %v622 = vmul.f32 %v574, 0.13333334
        %v623 = vmul.f32 %v575, 0.13333334
        %v624 = vmul.f32 %v576, 0.13333334
        %v625 = vmul.f32 %v577, 0.13333334
        %v626 = vsub.f32 %v610, 1.0
        %v627 = vsub.f32 %v611, 1.0
        %v628 = vsub.f32 %v612, 1.0
        %v629 = vsub.f32 %v613, 1.0
        %v630 = vsub.f32 %v614, 1.0
        %v631 = vsub.f32 %v615, 1.0
        %v632 = vsub.f32 %v616, 1.0
        %v633 = vsub.f32 %v617, 1.0
        %v634 = vsub.f32 %v618, 1.0
        %v635 = vsub.f32 %v619, 1.0
        %v636 = vsub.f32 %v620, 1.0
        %v637 = vsub.f32 %v621, 1.0
        %v638 = vsub.f32 %v622, 1.0
        %v639 = vsub.f32 %v623, 1.0
        %v640 = vsub.f32 %v624, 1.0
        %v641 = vsub.f32 %v625, 1.0
        %v642 = vld [vmem:[%s0] sm:$0x3]
        %v643 = vld [vmem:[%s1] sm:$0x1]
        %v644 = vlaneseq
        %v645 = vshrl.u32 %v644, 7
        %v646 = vsub.s32 0, %v645
        %v647 = vrot.slane %v642, %v646
        %v648 = vmul.f32 %v594, %v647
        %v649 = vmul.f32 %v595, %v647
        %v650 = vmul.f32 %v596, %v647
        %v651 = vmul.f32 %v597, %v647
        %v652 = vmul.f32 %v598, %v647
        %v653 = vmul.f32 %v599, %v647
        %v654 = vmul.f32 %v600, %v647
        %v655 = vmul.f32 %v601, %v647
        %v656 = vmul.f32 %v602, %v647
        %v657 = vmul.f32 %v603, %v647
        %v658 = vmul.f32 %v604, %v647
        %v659 = vmul.f32 %v605, %v647
        %v660 = vmul.f32 %v606, %v647
        %v661 = vmul.f32 %v607, %v647
        %v662 = vmul.f32 %v608, %v647
        %v663 = vmul.f32 %v609, %v647
        %v664 = vlaneseq
        %v665 = vshrl.u32 %v664, 7
        %v666 = vsub.s32 1, %v665
        %v667 = vrot.slane %v642, %v666
        %v668 = vmul.f32 %v626, %v667
        %v669 = vmul.f32 %v627, %v667
        %v670 = vmul.f32 %v628, %v667
        %v671 = vmul.f32 %v629, %v667
        %v672 = vmul.f32 %v630, %v667
        %v673 = vmul.f32 %v631, %v667
        %v674 = vmul.f32 %v632, %v667
        %v675 = vmul.f32 %v633, %v667
        %v676 = vmul.f32 %v634, %v667
        %v677 = vmul.f32 %v635, %v667
        %v678 = vmul.f32 %v636, %v667
        %v679 = vmul.f32 %v637, %v667
        %v680 = vmul.f32 %v638, %v667
        %v681 = vmul.f32 %v639, %v667
        %v682 = vmul.f32 %v640, %v667
        %v683 = vmul.f32 %v641, %v667
        %v684 = vadd.f32 %v648, %v668
        %v685 = vadd.f32 %v649, %v669
        %v686 = vadd.f32 %v650, %v670
        %v687 = vadd.f32 %v651, %v671
        %v688 = vadd.f32 %v652, %v672
        %v689 = vadd.f32 %v653, %v673
        %v690 = vadd.f32 %v654, %v674
        %v691 = vadd.f32 %v655, %v675
        %v692 = vadd.f32 %v656, %v676
        %v693 = vadd.f32 %v657, %v677
        %v694 = vadd.f32 %v658, %v678
        %v695 = vadd.f32 %v659, %v679
        %v696 = vadd.f32 %v660, %v680
        %v697 = vadd.f32 %v661, %v681
        %v698 = vadd.f32 %v662, %v682
        %v699 = vadd.f32 %v663, %v683
        %v701 = vlaneseq
        %v702 = vshrl.u32 %v701, 7
        %v703 = vsub.s32 0, %v702
        %v704 = vrot.slane %v643, %v703
        %v706 = vadd.f32 %v684, %v704
        %v707 = vadd.f32 %v685, %v704
        %v708 = vadd.f32 %v686, %v704
        %v709 = vadd.f32 %v687, %v704
        %v710 = vadd.f32 %v688, %v704
        %v711 = vadd.f32 %v689, %v704
        %v712 = vadd.f32 %v690, %v704
        %v713 = vadd.f32 %v691, %v704
        %v714 = vadd.f32 %v692, %v704
        %v715 = vadd.f32 %v693, %v704
        %v716 = vadd.f32 %v694, %v704
        %v717 = vadd.f32 %v695, %v704
        %v718 = vadd.f32 %v696, %v704
        %v719 = vadd.f32 %v697, %v704
        %v720 = vadd.f32 %v698, %v704
        %v721 = vadd.f32 %v699, %v704
        %v722 = vmul.f32 %v706, %v706
        %v723 = vmul.f32 %v707, %v707
        %v724 = vmul.f32 %v708, %v708
        %v725 = vmul.f32 %v709, %v709
        %v726 = vmul.f32 %v710, %v710
        %v727 = vmul.f32 %v711, %v711
        %v728 = vmul.f32 %v712, %v712
        %v729 = vmul.f32 %v713, %v713
        %v730 = vmul.f32 %v714, %v714
        %v731 = vmul.f32 %v715, %v715
        %v732 = vmul.f32 %v716, %v716
        %v733 = vmul.f32 %v717, %v717
        %v734 = vmul.f32 %v718, %v718
        %v735 = vmul.f32 %v719, %v719
        %v736 = vmul.f32 %v720, %v720
        %v737 = vmul.f32 %v721, %v721
        %v738 = vsub.f32 0.0, %v722
        %v739 = vsub.f32 0.0, %v723
        %v740 = vsub.f32 0.0, %v724
        %v741 = vsub.f32 0.0, %v725
        %v742 = vsub.f32 0.0, %v726
        %v743 = vsub.f32 0.0, %v727
        %v744 = vsub.f32 0.0, %v728
        %v745 = vsub.f32 0.0, %v729
        %v746 = vsub.f32 0.0, %v730
        %v747 = vsub.f32 0.0, %v731
        %v748 = vsub.f32 0.0, %v732
        %v749 = vsub.f32 0.0, %v733
        %v750 = vsub.f32 0.0, %v734
        %v751 = vsub.f32 0.0, %v735
        %v752 = vsub.f32 0.0, %v736
        %v753 = vsub.f32 0.0, %v737
        %v754 = vmul.f32 %v738, 1.442695
        %v755 = vpow.pop %v754
        %v756 = vmul.f32 %v739, 1.442695
        %v757 = vpow.pop %v756
        %v758 = vmul.f32 %v740, 1.442695
        %v759 = vpow.pop %v758
        %v760 = vmul.f32 %v741, 1.442695
        %v761 = vpow.pop %v760
        %v762 = vmul.f32 %v742, 1.442695
        %v763 = vpow.pop %v762
        %v764 = vmul.f32 %v743, 1.442695
        %v765 = vpow.pop %v764
        %v766 = vmul.f32 %v744, 1.442695
        %v767 = vpow.pop %v766
        %v768 = vmul.f32 %v745, 1.442695
        %v769 = vpow.pop %v768
        %v770 = vmul.f32 %v746, 1.442695
        %v771 = vpow.pop %v770
        %v772 = vmul.f32 %v747, 1.442695
        %v773 = vpow.pop %v772
        %v774 = vmul.f32 %v748, 1.442695
        %v775 = vpow.pop %v774
        %v776 = vmul.f32 %v749, 1.442695
        %v777 = vpow.pop %v776
        %v778 = vmul.f32 %v750, 1.442695
        %v779 = vpow.pop %v778
        %v780 = vmul.f32 %v751, 1.442695
        %v781 = vpow.pop %v780
        %v782 = vmul.f32 %v752, 1.442695
        %v783 = vpow.pop %v782
        %v784 = vmul.f32 %v753, 1.442695
        %v785 = vpow.pop %v784
        %v786 = vld [vmem:[%s2] sm:$0xff]
        %v787 = vld [vmem:[%s2 + $0x8] sm:$0xff]
        %v788 = vld [vmem:[%s2 + $0x10] sm:$0xff]
        %v789 = vld [vmem:[%s2 + $0x18] sm:$0xff]
        %v790 = vld [vmem:[%s2 + $0x20] sm:$0xff]
        %v791 = vld [vmem:[%s2 + $0x28] sm:$0xff]
        %v792 = vld [vmem:[%s2 + $0x30] sm:$0xff]
        %v793 = vld [vmem:[%s2 + $0x38] sm:$0xff]
        %v794 = vld [vmem:[%s2 + $0x40] sm:$0xff]
        %v795 = vld [vmem:[%s2 + $0x48] sm:$0xff]
        %v796 = vld [vmem:[%s2 + $0x50] sm:$0xff]
        %v797 = vld [vmem:[%s2 + $0x58] sm:$0xff]
        %v798 = vld [vmem:[%s2 + $0x60] sm:$0xff]
        %v799 = vld [vmem:[%s2 + $0x68] sm:$0xff]
        %v800 = vld [vmem:[%s2 + $0x70] sm:$0xff]
        %v801 = vld [vmem:[%s2 + $0x78] sm:$0xff]
        %v802 = vld [vmem:[%s3] sm:$0x1]
        %v804 = vlaneseq
        %v805 = vshrl.u32 %v804, 7
        %v806 = vsub.s32 0, %v805
        %v807 = vrot.slane %v802, %v806
        %809 = vmatprep.subr.mxu0 0.0
        %810 = vmatpush1.msra.mxu0 %v786
        %811 = vmatprep.subr.mxu0 0.0
        %812 = vmatpush1.msra.mxu0 %v787
        %813 = vmatprep.subr.mxu0 0.0
        %814 = vmatpush1.msra.mxu0 %v788
        %815 = vmatprep.subr.mxu0 0.0
        %816 = vmatpush1.msra.mxu0 %v789
        %817 = vmatprep.subr.mxu0 0.0
        %818 = vmatpush1.msra.mxu0 %v790
        %819 = vmatprep.subr.mxu0 0.0
        %820 = vmatpush1.msra.mxu0 %v791
        %821 = vmatprep.subr.mxu0 0.0
        %822 = vmatpush1.msra.mxu0 %v792
        %823 = vmatprep.subr.mxu0 0.0
        %824 = vmatpush1.msra.mxu0 %v793
        %825 = vmatprep.subr.mxu0 0.0
        %826 = vmatpush1.msra.mxu0 %v794
        %827 = vmatprep.subr.mxu0 0.0
        %828 = vmatpush1.msra.mxu0 %v795
        %829 = vmatprep.subr.mxu0 0.0
        %830 = vmatpush1.msra.mxu0 %v796
        %831 = vmatprep.subr.mxu0 0.0
        %832 = vmatpush1.msra.mxu0 %v797
        %833 = vmatprep.subr.mxu0 0.0
        %834 = vmatpush1.msra.mxu0 %v798
        %835 = vmatprep.subr.mxu0 0.0
        %836 = vmatpush1.msra.mxu0 %v799
        %837 = vmatprep.subr.mxu0 0.0
        %838 = vmatpush1.msra.mxu0 %v800
        %839 = vmatprep.subr.mxu0 0.0
        %840 = vmatpush1.msra.mxu0 %v801
        %841 = vmatprep.subr.mxu0 0.0
        %842 = vmatpush1.msra.mxu0 0.0
        %843 = vmatprep.subr.mxu0 0.0
        %844 = vmatpush1.msra.mxu0 0.0
        %845 = vmatprep.subr.mxu0 0.0
        %846 = vmatpush1.msra.mxu0 0.0
        %847 = vmatprep.subr.mxu0 0.0
        %848 = vmatpush1.msra.mxu0 0.0
        %849 = vmatprep.subr.mxu0 0.0
        %850 = vmatpush1.msra.mxu0 0.0
        %851 = vmatprep.subr.mxu0 0.0
        %852 = vmatpush1.msra.mxu0 0.0
        %853 = vmatprep.subr.mxu0 0.0
        %854 = vmatpush1.msra.mxu0 0.0
        %855 = vmatprep.subr.mxu0 0.0
        %856 = vmatpush1.msra.mxu0 0.0
        %857 = vmatprep.subr.mxu0 0.0
        %858 = vmatpush1.msra.mxu0 0.0
        %859 = vmatprep.subr.mxu0 0.0
        %860 = vmatpush1.msra.mxu0 0.0
        %861 = vmatprep.subr.mxu0 0.0
        %862 = vmatpush1.msra.mxu0 0.0
        %863 = vmatprep.subr.mxu0 0.0
        %864 = vmatpush1.msra.mxu0 0.0
        %865 = vmatprep.subr.mxu0 0.0
        %866 = vmatpush1.msra.mxu0 0.0
        %867 = vmatprep.subr.mxu0 0.0
        %868 = vmatpush1.msra.mxu0 0.0
        %869 = vmatprep.subr.mxu0 0.0
        %870 = vmatpush1.msra.mxu0 0.0
        %871 = vmatprep.subr.mxu0 0.0
        %872 = vmatpush1.msra.mxu0 0.0
        %873 = vmatprep.mubr.f32.mxu0 0.0
        %874 = vmatmul.mubr.f32.gmra.mrb[0].mxu0 %v755
        %v875 = vpop.f32.mrb[0].mxu0
        %v876 = vadd.f32 %v807, %v875
        %v877 = vpop.f32.mrb[0].mxu0
        %878 = vmatprep.mubr.f32.mxu0 0.0
        %879 = vmatmul.mubr.f32.gmra.mrb[0].mxu0 %v757
        %v880 = vpop.f32.mrb[0].mxu0
        %v881 = vadd.f32 %v807, %v880
        %v882 = vpop.f32.mrb[0].mxu0
        %883 = vmatprep.mubr.f32.mxu0 0.0
        %884 = vmatmul.mubr.f32.gmra.mrb[0].mxu0 %v759
        %v885 = vpop.f32.mrb[0].mxu0
        %v886 = vadd.f32 %v807, %v885
        %v887 = vpop.f32.mrb[0].mxu0
        %888 = vmatprep.mubr.f32.mxu0 0.0
        %889 = vmatmul.mubr.f32.gmra.mrb[0].mxu0 %v761
        %v890 = vpop.f32.mrb[0].mxu0
        %v891 = vadd.f32 %v807, %v890
        %v892 = vpop.f32.mrb[0].mxu0
        %893 = vmatprep.mubr.f32.mxu0 0.0
        %894 = vmatmul.mubr.f32.gmra.mrb[0].mxu0 %v763
        %v895 = vpop.f32.mrb[0].mxu0
        %v896 = vadd.f32 %v807, %v895
        %v897 = vpop.f32.mrb[0].mxu0
        %898 = vmatprep.mubr.f32.mxu0 0.0
        %899 = vmatmul.mubr.f32.gmra.mrb[0].mxu0 %v765
        %v900 = vpop.f32.mrb[0].mxu0
        %v901 = vadd.f32 %v807, %v900
        %v902 = vpop.f32.mrb[0].mxu0
        %903 = vmatprep.mubr.f32.mxu0 0.0
        %904 = vmatmul.mubr.f32.gmra.mrb[0].mxu0 %v767
        %v905 = vpop.f32.mrb[0].mxu0
        %v906 = vadd.f32 %v807, %v905
        %v907 = vpop.f32.mrb[0].mxu0
        %908 = vmatprep.mubr.f32.mxu0 0.0
        %909 = vmatmul.mubr.f32.gmra.mrb[0].mxu0 %v769
        %v910 = vpop.f32.mrb[0].mxu0
        %v911 = vadd.f32 %v807, %v910
        %v912 = vpop.f32.mrb[0].mxu0
        %913 = vmatprep.mubr.f32.mxu0 0.0
        %914 = vmatmul.mubr.f32.gmra.mrb[0].mxu0 %v771
        %v915 = vpop.f32.mrb[0].mxu0
        %v916 = vadd.f32 %v807, %v915
        %v917 = vpop.f32.mrb[0].mxu0
        %918 = vmatprep.mubr.f32.mxu0 0.0
        %919 = vmatmul.mubr.f32.gmra.mrb[0].mxu0 %v773
        %v920 = vpop.f32.mrb[0].mxu0
        %v921 = vadd.f32 %v807, %v920
        %v922 = vpop.f32.mrb[0].mxu0
        %923 = vmatprep.mubr.f32.mxu0 0.0
        %924 = vmatmul.mubr.f32.gmra.mrb[0].mxu0 %v775
        %v925 = vpop.f32.mrb[0].mxu0
        %v926 = vadd.f32 %v807, %v925
        %v927 = vpop.f32.mrb[0].mxu0
        %928 = vmatprep.mubr.f32.mxu0 0.0
        %929 = vmatmul.mubr.f32.gmra.mrb[0].mxu0 %v777
        %v930 = vpop.f32.mrb[0].mxu0
        %v931 = vadd.f32 %v807, %v930
        %v932 = vpop.f32.mrb[0].mxu0
        %933 = vmatprep.mubr.f32.mxu0 0.0
        %934 = vmatmul.mubr.f32.gmra.mrb[0].mxu0 %v779
        %v935 = vpop.f32.mrb[0].mxu0
        %v936 = vadd.f32 %v807, %v935
        %v937 = vpop.f32.mrb[0].mxu0
        %938 = vmatprep.mubr.f32.mxu0 0.0
        %939 = vmatmul.mubr.f32.gmra.mrb[0].mxu0 %v781
        %v940 = vpop.f32.mrb[0].mxu0
        %v941 = vadd.f32 %v807, %v940
        %v942 = vpop.f32.mrb[0].mxu0
        %943 = vmatprep.mubr.f32.mxu0 0.0
        %944 = vmatmul.mubr.f32.gmra.mrb[0].mxu0 %v783
        %v945 = vpop.f32.mrb[0].mxu0
        %v946 = vadd.f32 %v807, %v945
        %v947 = vpop.f32.mrb[0].mxu0
        %948 = vmatprep.mubr.f32.mxu0 0.0
        %949 = vmatmul.mubr.f32.gmra.mrb[0].mxu0 %v785
        %v950 = vpop.f32.mrb[0].mxu0
        %v951 = vadd.f32 %v807, %v950
        %v952 = vpop.f32.mrb[0].mxu0
        %953 = vdwg.mxu0
        %v954 = vmul.f32 %v876, %v876
        %v955 = vmul.f32 %v881, %v881
        %v956 = vmul.f32 %v886, %v886
        %v957 = vmul.f32 %v891, %v891
        %v958 = vmul.f32 %v896, %v896
        %v959 = vmul.f32 %v901, %v901
        %v960 = vmul.f32 %v906, %v906
        %v961 = vmul.f32 %v911, %v911
        %v962 = vmul.f32 %v916, %v916
        %v963 = vmul.f32 %v921, %v921
        %v964 = vmul.f32 %v926, %v926
        %v965 = vmul.f32 %v931, %v931
        %v966 = vmul.f32 %v936, %v936
        %v967 = vmul.f32 %v941, %v941
        %v968 = vmul.f32 %v946, %v946
        %v969 = vmul.f32 %v951, %v951
        %v970 = vsub.f32 0.0, %v954
        %v971 = vsub.f32 0.0, %v955
        %v972 = vsub.f32 0.0, %v956
        %v973 = vsub.f32 0.0, %v957
        %v974 = vsub.f32 0.0, %v958
        %v975 = vsub.f32 0.0, %v959
        %v976 = vsub.f32 0.0, %v960
        %v977 = vsub.f32 0.0, %v961
        %v978 = vsub.f32 0.0, %v962
        %v979 = vsub.f32 0.0, %v963
        %v980 = vsub.f32 0.0, %v964
        %v981 = vsub.f32 0.0, %v965
        %v982 = vsub.f32 0.0, %v966
        %v983 = vsub.f32 0.0, %v967
        %v984 = vsub.f32 0.0, %v968
        %v985 = vsub.f32 0.0, %v969
        %v986 = vmul.f32 %v970, 1.442695
        %v987 = vpow.pop %v986
        %v988 = vmul.f32 %v971, 1.442695
        %v989 = vpow.pop %v988
        %v990 = vmul.f32 %v972, 1.442695
        %v991 = vpow.pop %v990
        %v992 = vmul.f32 %v973, 1.442695
        %v993 = vpow.pop %v992
        %v994 = vmul.f32 %v974, 1.442695
        %v995 = vpow.pop %v994
        %v996 = vmul.f32 %v975, 1.442695
        %v997 = vpow.pop %v996
        %v998 = vmul.f32 %v976, 1.442695
        %v999 = vpow.pop %v998
        %v1000 = vmul.f32 %v977, 1.442695
        %v1001 = vpow.pop %v1000
        %v1002 = vmul.f32 %v978, 1.442695
        %v1003 = vpow.pop %v1002
        %v1004 = vmul.f32 %v979, 1.442695
        %v1005 = vpow.pop %v1004
        %v1006 = vmul.f32 %v980, 1.442695
        %v1007 = vpow.pop %v1006
        %v1008 = vmul.f32 %v981, 1.442695
        %v1009 = vpow.pop %v1008
        %v1010 = vmul.f32 %v982, 1.442695
        %v1011 = vpow.pop %v1010
        %v1012 = vmul.f32 %v983, 1.442695
        %v1013 = vpow.pop %v1012
        %v1014 = vmul.f32 %v984, 1.442695
        %v1015 = vpow.pop %v1014
        %v1016 = vmul.f32 %v985, 1.442695
        %v1017 = vpow.pop %v1016
        %v1018 = vld [vmem:[#allocation2] sm:$0xff]
        %v1019 = vld [vmem:[#allocation2 + $0x8] sm:$0xff]
        %v1020 = vld [vmem:[#allocation2 + $0x10] sm:$0xff]
        %v1021 = vld [vmem:[#allocation2 + $0x18] sm:$0xff]
        %v1022 = vld [vmem:[#allocation2 + $0x20] sm:$0xff]
        %v1023 = vld [vmem:[#allocation2 + $0x28] sm:$0xff]
        %v1024 = vld [vmem:[#allocation2 + $0x30] sm:$0xff]
        %v1025 = vld [vmem:[#allocation2 + $0x38] sm:$0xff]
        %v1026 = vld [vmem:[#allocation2 + $0x40] sm:$0xff]
        %v1027 = vld [vmem:[#allocation2 + $0x48] sm:$0xff]
        %v1028 = vld [vmem:[#allocation2 + $0x50] sm:$0xff]
        %v1029 = vld [vmem:[#allocation2 + $0x58] sm:$0xff]
        %v1030 = vld [vmem:[#allocation2 + $0x60] sm:$0xff]
        %v1031 = vld [vmem:[#allocation2 + $0x68] sm:$0xff]
        %v1032 = vld [vmem:[#allocation2 + $0x70] sm:$0xff]
        %v1033 = vld [vmem:[#allocation2 + $0x78] sm:$0xff]
        %v1034 = vld [vmem:[%s5] sm:$0x1]
        %v1036 = vlaneseq
        %v1037 = vshrl.u32 %v1036, 7
        %v1038 = vsub.s32 0, %v1037
        %v1039 = vrot.slane %v1034, %v1038
        %1041 = vmatprep.subr.mxu0 0.0
        %1042 = vmatpush1.msra.mxu0 %v1018
        %1043 = vmatprep.subr.mxu0 0.0
        %1044 = vmatpush1.msra.mxu0 %v1019
        %1045 = vmatprep.subr.mxu0 0.0
        %1046 = vmatpush1.msra.mxu0 %v1020
        %1047 = vmatprep.subr.mxu0 0.0
        %1048 = vmatpush1.msra.mxu0 %v1021
        %1049 = vmatprep.subr.mxu0 0.0
        %1050 = vmatpush1.msra.mxu0 %v1022
        %1051 = vmatprep.subr.mxu0 0.0
        %1052 = vmatpush1.msra.mxu0 %v1023
        %1053 = vmatprep.subr.mxu0 0.0
        %1054 = vmatpush1.msra.mxu0 %v1024
        %1055 = vmatprep.subr.mxu0 0.0
        %1056 = vmatpush1.msra.mxu0 %v1025
        %1057 = vmatprep.subr.mxu0 0.0
        %1058 = vmatpush1.msra.mxu0 %v1026
        %1059 = vmatprep.subr.mxu0 0.0
        %1060 = vmatpush1.msra.mxu0 %v1027
        %1061 = vmatprep.subr.mxu0 0.0
        %1062 = vmatpush1.msra.mxu0 %v1028
        %1063 = vmatprep.subr.mxu0 0.0
        %1064 = vmatpush1.msra.mxu0 %v1029
        %1065 = vmatprep.subr.mxu0 0.0
        %1066 = vmatpush1.msra.mxu0 %v1030
        %1067 = vmatprep.subr.mxu0 0.0
        %1068 = vmatpush1.msra.mxu0 %v1031
        %1069 = vmatprep.subr.mxu0 0.0
        %1070 = vmatpush1.msra.mxu0 %v1032
        %1071 = vmatprep.subr.mxu0 0.0
        %1072 = vmatpush1.msra.mxu0 %v1033
        %1073 = vmatprep.subr.mxu0 0.0
        %1074 = vmatpush1.msra.mxu0 0.0
        %1075 = vmatprep.subr.mxu0 0.0
        %1076 = vmatpush1.msra.mxu0 0.0
        %1077 = vmatprep.subr.mxu0 0.0
        %1078 = vmatpush1.msra.mxu0 0.0
        %1079 = vmatprep.subr.mxu0 0.0
        %1080 = vmatpush1.msra.mxu0 0.0
        %1081 = vmatprep.subr.mxu0 0.0
        %1082 = vmatpush1.msra.mxu0 0.0
        %1083 = vmatprep.subr.mxu0 0.0
        %1084 = vmatpush1.msra.mxu0 0.0
        %1085 = vmatprep.subr.mxu0 0.0
        %1086 = vmatpush1.msra.mxu0 0.0
        %1087 = vmatprep.subr.mxu0 0.0
        %1088 = vmatpush1.msra.mxu0 0.0
        %1089 = vmatprep.subr.mxu0 0.0
        %1090 = vmatpush1.msra.mxu0 0.0
        %1091 = vmatprep.subr.mxu0 0.0
        %1092 = vmatpush1.msra.mxu0 0.0
        %1093 = vmatprep.subr.mxu0 0.0
        %1094 = vmatpush1.msra.mxu0 0.0
        %1095 = vmatprep.subr.mxu0 0.0
        %1096 = vmatpush1.msra.mxu0 0.0
        %1097 = vmatprep.subr.mxu0 0.0
        %1098 = vmatpush1.msra.mxu0 0.0
        %1099 = vmatprep.subr.mxu0 0.0
        %1100 = vmatpush1.msra.mxu0 0.0
        %1101 = vmatprep.subr.mxu0 0.0
        %1102 = vmatpush1.msra.mxu0 0.0
        %1103 = vmatprep.subr.mxu0 0.0
        %1104 = vmatpush1.msra.mxu0 0.0
        %1105 = vmatprep.mubr.f32.mxu0 0.0
        %1106 = vmatmul.mubr.f32.gmra.mrb[0].mxu0 %v987
        %v1107 = vpop.f32.mrb[0].mxu0
        %v1108 = vadd.f32 %v1039, %v1107
        %v1109 = vpop.f32.mrb[0].mxu0
        %1110 = vmatprep.mubr.f32.mxu0 0.0
        %1111 = vmatmul.mubr.f32.gmra.mrb[0].mxu0 %v989
        %v1112 = vpop.f32.mrb[0].mxu0
        %v1113 = vadd.f32 %v1039, %v1112
        %v1114 = vpop.f32.mrb[0].mxu0
        %1115 = vmatprep.mubr.f32.mxu0 0.0
        %1116 = vmatmul.mubr.f32.gmra.mrb[0].mxu0 %v991
        %v1117 = vpop.f32.mrb[0].mxu0
        %v1118 = vadd.f32 %v1039, %v1117
        %v1119 = vpop.f32.mrb[0].mxu0
        %1120 = vmatprep.mubr.f32.mxu0 0.0
        %1121 = vmatmul.mubr.f32.gmra.mrb[0].mxu0 %v993
        %v1122 = vpop.f32.mrb[0].mxu0
        %v1123 = vadd.f32 %v1039, %v1122
        %v1124 = vpop.f32.mrb[0].mxu0
        %1125 = vmatprep.mubr.f32.mxu0 0.0
        %1126 = vmatmul.mubr.f32.gmra.mrb[0].mxu0 %v995
        %v1127 = vpop.f32.mrb[0].mxu0
        %v1128 = vadd.f32 %v1039, %v1127
        %v1129 = vpop.f32.mrb[0].mxu0
        %1130 = vmatprep.mubr.f32.mxu0 0.0
        %1131 = vmatmul.mubr.f32.gmra.mrb[0].mxu0 %v997
        %v1132 = vpop.f32.mrb[0].mxu0
        %v1133 = vadd.f32 %v1039, %v1132
        %v1134 = vpop.f32.mrb[0].mxu0
        %1135 = vmatprep.mubr.f32.mxu0 0.0
        %1136 = vmatmul.mubr.f32.gmra.mrb[0].mxu0 %v999
        %v1137 = vpop.f32.mrb[0].mxu0
        %v1138 = vadd.f32 %v1039, %v1137
        %v1139 = vpop.f32.mrb[0].mxu0
        %1140 = vmatprep.mubr.f32.mxu0 0.0
        %1141 = vmatmul.mubr.f32.gmra.mrb[0].mxu0 %v1001
        %v1142 = vpop.f32.mrb[0].mxu0
        %v1143 = vadd.f32 %v1039, %v1142
        %v1144 = vpop.f32.mrb[0].mxu0
        %1145 = vmatprep.mubr.f32.mxu0 0.0
        %1146 = vmatmul.mubr.f32.gmra.mrb[0].mxu0 %v1003
        %v1147 = vpop.f32.mrb[0].mxu0
        %v1148 = vadd.f32 %v1039, %v1147
        %v1149 = vpop.f32.mrb[0].mxu0
        %1150 = vmatprep.mubr.f32.mxu0 0.0
        %1151 = vmatmul.mubr.f32.gmra.mrb[0].mxu0 %v1005
        %v1152 = vpop.f32.mrb[0].mxu0
        %v1153 = vadd.f32 %v1039, %v1152
        %v1154 = vpop.f32.mrb[0].mxu0
        %1155 = vmatprep.mubr.f32.mxu0 0.0
        %1156 = vmatmul.mubr.f32.gmra.mrb[0].mxu0 %v1007
        %v1157 = vpop.f32.mrb[0].mxu0
        %v1158 = vadd.f32 %v1039, %v1157
        %v1159 = vpop.f32.mrb[0].mxu0
        %1160 = vmatprep.mubr.f32.mxu0 0.0
        %1161 = vmatmul.mubr.f32.gmra.mrb[0].mxu0 %v1009
        %v1162 = vpop.f32.mrb[0].mxu0
        %v1163 = vadd.f32 %v1039, %v1162
        %v1164 = vpop.f32.mrb[0].mxu0
        %1165 = vmatprep.mubr.f32.mxu0 0.0
        %1166 = vmatmul.mubr.f32.gmra.mrb[0].mxu0 %v1011
        %v1167 = vpop.f32.mrb[0].mxu0
        %v1168 = vadd.f32 %v1039, %v1167
        %v1169 = vpop.f32.mrb[0].mxu0
        %1170 = vmatprep.mubr.f32.mxu0 0.0
        %1171 = vmatmul.mubr.f32.gmra.mrb[0].mxu0 %v1013
        %v1172 = vpop.f32.mrb[0].mxu0
        %v1173 = vadd.f32 %v1039, %v1172
        %v1174 = vpop.f32.mrb[0].mxu0
        %1175 = vmatprep.mubr.f32.mxu0 0.0
        %1176 = vmatmul.mubr.f32.gmra.mrb[0].mxu0 %v1015
        %v1177 = vpop.f32.mrb[0].mxu0
        %v1178 = vadd.f32 %v1039, %v1177
        %v1179 = vpop.f32.mrb[0].mxu0
        %1180 = vmatprep.mubr.f32.mxu0 0.0
        %1181 = vmatmul.mubr.f32.gmra.mrb[0].mxu0 %v1017
        %v1182 = vpop.f32.mrb[0].mxu0
        %v1183 = vadd.f32 %v1039, %v1182
        %v1184 = vpop.f32.mrb[0].mxu0
        %1185 = vdwg.mxu0
        %v1186 = vmul.f32 %v1108, %v1108
        %v1187 = vmul.f32 %v1113, %v1113
        %v1188 = vmul.f32 %v1118, %v1118
        %v1189 = vmul.f32 %v1123, %v1123
        %v1190 = vmul.f32 %v1128, %v1128
        %v1191 = vmul.f32 %v1133, %v1133
        %v1192 = vmul.f32 %v1138, %v1138
        %v1193 = vmul.f32 %v1143, %v1143
        %v1194 = vmul.f32 %v1148, %v1148
        %v1195 = vmul.f32 %v1153, %v1153
        %v1196 = vmul.f32 %v1158, %v1158
        %v1197 = vmul.f32 %v1163, %v1163
        %v1198 = vmul.f32 %v1168, %v1168
        %v1199 = vmul.f32 %v1173, %v1173
        %v1200 = vmul.f32 %v1178, %v1178
        %v1201 = vmul.f32 %v1183, %v1183
        %v1202 = vsub.f32 0.0, %v1186
        %v1203 = vsub.f32 0.0, %v1187
        %v1204 = vsub.f32 0.0, %v1188
        %v1205 = vsub.f32 0.0, %v1189
        %v1206 = vsub.f32 0.0, %v1190
        %v1207 = vsub.f32 0.0, %v1191
        %v1208 = vsub.f32 0.0, %v1192
        %v1209 = vsub.f32 0.0, %v1193
        %v1210 = vsub.f32 0.0, %v1194
        %v1211 = vsub.f32 0.0, %v1195
        %v1212 = vsub.f32 0.0, %v1196
        %v1213 = vsub.f32 0.0, %v1197
        %v1214 = vsub.f32 0.0, %v1198
        %v1215 = vsub.f32 0.0, %v1199
        %v1216 = vsub.f32 0.0, %v1200
        %v1217 = vsub.f32 0.0, %v1201
        %v1218 = vmul.f32 %v1202, 1.442695
        %v1219 = vpow.pop %v1218
        %v1220 = vmul.f32 %v1203, 1.442695
        %v1221 = vpow.pop %v1220
        %v1222 = vmul.f32 %v1204, 1.442695
        %v1223 = vpow.pop %v1222
        %v1224 = vmul.f32 %v1205, 1.442695
        %v1225 = vpow.pop %v1224
        %v1226 = vmul.f32 %v1206, 1.442695
        %v1227 = vpow.pop %v1226
        %v1228 = vmul.f32 %v1207, 1.442695
        %v1229 = vpow.pop %v1228
        %v1230 = vmul.f32 %v1208, 1.442695
        %v1231 = vpow.pop %v1230
        %v1232 = vmul.f32 %v1209, 1.442695
        %v1233 = vpow.pop %v1232
        %v1234 = vmul.f32 %v1210, 1.442695
        %v1235 = vpow.pop %v1234
        %v1236 = vmul.f32 %v1211, 1.442695
        %v1237 = vpow.pop %v1236
        %v1238 = vmul.f32 %v1212, 1.442695
        %v1239 = vpow.pop %v1238
        %v1240 = vmul.f32 %v1213, 1.442695
        %v1241 = vpow.pop %v1240
        %v1242 = vmul.f32 %v1214, 1.442695
        %v1243 = vpow.pop %v1242
        %v1244 = vmul.f32 %v1215, 1.442695
        %v1245 = vpow.pop %v1244
        %v1246 = vmul.f32 %v1216, 1.442695
        %v1247 = vpow.pop %v1246
        %v1248 = vmul.f32 %v1217, 1.442695
        %v1249 = vpow.pop %v1248
        %v1250 = vld [vmem:[%s6] sm:$0xff]
        %v1251 = vld [vmem:[%s6 + $0x8] sm:$0xff]
        %v1252 = vld [vmem:[%s6 + $0x10] sm:$0xff]
        %v1253 = vld [vmem:[%s6 + $0x18] sm:$0xff]
        %v1254 = vld [vmem:[%s6 + $0x20] sm:$0xff]
        %v1255 = vld [vmem:[%s6 + $0x28] sm:$0xff]
        %v1256 = vld [vmem:[%s6 + $0x30] sm:$0xff]
        %v1257 = vld [vmem:[%s6 + $0x38] sm:$0xff]
        %v1258 = vld [vmem:[%s6 + $0x40] sm:$0xff]
        %v1259 = vld [vmem:[%s6 + $0x48] sm:$0xff]
        %v1260 = vld [vmem:[%s6 + $0x50] sm:$0xff]
        %v1261 = vld [vmem:[%s6 + $0x58] sm:$0xff]
        %v1262 = vld [vmem:[%s6 + $0x60] sm:$0xff]
        %v1263 = vld [vmem:[%s6 + $0x68] sm:$0xff]
        %v1264 = vld [vmem:[%s6 + $0x70] sm:$0xff]
        %v1265 = vld [vmem:[%s6 + $0x78] sm:$0xff]
        %v1266 = vld [vmem:[%s7] sm:$0x1]
        %v1268 = vlaneseq
        %v1269 = vshrl.u32 %v1268, 7
        %v1270 = vsub.s32 0, %v1269
        %v1271 = vrot.slane %v1266, %v1270
        %1273 = vmatprep.subr.mxu0 0.0
        %1274 = vmatpush1.msra.mxu0 %v1250
        %1275 = vmatprep.subr.mxu0 0.0
        %1276 = vmatpush1.msra.mxu0 %v1251
        %1277 = vmatprep.subr.mxu0 0.0
        %1278 = vmatpush1.msra.mxu0 %v1252
        %1279 = vmatprep.subr.mxu0 0.0
        %1280 = vmatpush1.msra.mxu0 %v1253
        %1281 = vmatprep.subr.mxu0 0.0
        %1282 = vmatpush1.msra.mxu0 %v1254
        %1283 = vmatprep.subr.mxu0 0.0
        %1284 = vmatpush1.msra.mxu0 %v1255
        %1285 = vmatprep.subr.mxu0 0.0
        %1286 = vmatpush1.msra.mxu0 %v1256
        %1287 = vmatprep.subr.mxu0 0.0
        %1288 = vmatpush1.msra.mxu0 %v1257
        %1289 = vmatprep.subr.mxu0 0.0
        %1290 = vmatpush1.msra.mxu0 %v1258
        %1291 = vmatprep.subr.mxu0 0.0
        %1292 = vmatpush1.msra.mxu0 %v1259
        %1293 = vmatprep.subr.mxu0 0.0
        %1294 = vmatpush1.msra.mxu0 %v1260
        %1295 = vmatprep.subr.mxu0 0.0
        %1296 = vmatpush1.msra.mxu0 %v1261
        %1297 = vmatprep.subr.mxu0 0.0
        %1298 = vmatpush1.msra.mxu0 %v1262
        %1299 = vmatprep.subr.mxu0 0.0
        %1300 = vmatpush1.msra.mxu0 %v1263
        %1301 = vmatprep.subr.mxu0 0.0
        %1302 = vmatpush1.msra.mxu0 %v1264
        %1303 = vmatprep.subr.mxu0 0.0
        %1304 = vmatpush1.msra.mxu0 %v1265
        %1305 = vmatprep.subr.mxu0 0.0
        %1306 = vmatpush1.msra.mxu0 0.0
        %1307 = vmatprep.subr.mxu0 0.0
        %1308 = vmatpush1.msra.mxu0 0.0
        %1309 = vmatprep.subr.mxu0 0.0
        %1310 = vmatpush1.msra.mxu0 0.0
        %1311 = vmatprep.subr.mxu0 0.0
        %1312 = vmatpush1.msra.mxu0 0.0
        %1313 = vmatprep.subr.mxu0 0.0
        %1314 = vmatpush1.msra.mxu0 0.0
        %1315 = vmatprep.subr.mxu0 0.0
        %1316 = vmatpush1.msra.mxu0 0.0
        %1317 = vmatprep.subr.mxu0 0.0
        %1318 = vmatpush1.msra.mxu0 0.0
        %1319 = vmatprep.subr.mxu0 0.0
        %1320 = vmatpush1.msra.mxu0 0.0
        %1321 = vmatprep.subr.mxu0 0.0
        %1322 = vmatpush1.msra.mxu0 0.0
        %1323 = vmatprep.subr.mxu0 0.0
        %1324 = vmatpush1.msra.mxu0 0.0
        %1325 = vmatprep.subr.mxu0 0.0
        %1326 = vmatpush1.msra.mxu0 0.0
        %1327 = vmatprep.subr.mxu0 0.0
        %1328 = vmatpush1.msra.mxu0 0.0
        %1329 = vmatprep.subr.mxu0 0.0
        %1330 = vmatpush1.msra.mxu0 0.0
        %1331 = vmatprep.subr.mxu0 0.0
        %1332 = vmatpush1.msra.mxu0 0.0
        %1333 = vmatprep.subr.mxu0 0.0
        %1334 = vmatpush1.msra.mxu0 0.0
        %1335 = vmatprep.subr.mxu0 0.0
        %1336 = vmatpush1.msra.mxu0 0.0
        %1337 = vmatprep.mubr.f32.mxu0 0.0
        %1338 = vmatmul.mubr.f32.gmra.mrb[0].mxu0 %v1219
        %v1339 = vpop.f32.mrb[0].mxu0
        %v1340 = vadd.f32 %v1271, %v1339
        %v1341 = vpop.f32.mrb[0].mxu0
        %1342 = vmatprep.mubr.f32.mxu0 0.0
        %1343 = vmatmul.mubr.f32.gmra.mrb[0].mxu0 %v1221
        %v1344 = vpop.f32.mrb[0].mxu0
        %v1345 = vadd.f32 %v1271, %v1344
        %v1346 = vpop.f32.mrb[0].mxu0
        %1347 = vmatprep.mubr.f32.mxu0 0.0
        %1348 = vmatmul.mubr.f32.gmra.mrb[0].mxu0 %v1223
        %v1349 = vpop.f32.mrb[0].mxu0
        %v1350 = vadd.f32 %v1271, %v1349
        %v1351 = vpop.f32.mrb[0].mxu0
        %1352 = vmatprep.mubr.f32.mxu0 0.0
        %1353 = vmatmul.mubr.f32.gmra.mrb[0].mxu0 %v1225
        %v1354 = vpop.f32.mrb[0].mxu0
        %v1355 = vadd.f32 %v1271, %v1354
        %v1356 = vpop.f32.mrb[0].mxu0
        %1357 = vmatprep.mubr.f32.mxu0 0.0
        %1358 = vmatmul.mubr.f32.gmra.mrb[0].mxu0 %v1227
        %v1359 = vpop.f32.mrb[0].mxu0
        %v1360 = vadd.f32 %v1271, %v1359
        %v1361 = vpop.f32.mrb[0].mxu0
        %1362 = vmatprep.mubr.f32.mxu0 0.0
        %1363 = vmatmul.mubr.f32.gmra.mrb[0].mxu0 %v1229
        %v1364 = vpop.f32.mrb[0].mxu0
        %v1365 = vadd.f32 %v1271, %v1364
        %v1366 = vpop.f32.mrb[0].mxu0
        %1367 = vmatprep.mubr.f32.mxu0 0.0
        %1368 = vmatmul.mubr.f32.gmra.mrb[0].mxu0 %v1231
        %v1369 = vpop.f32.mrb[0].mxu0
        %v1370 = vadd.f32 %v1271, %v1369
        %v1371 = vpop.f32.mrb[0].mxu0
        %1372 = vmatprep.mubr.f32.mxu0 0.0
        %1373 = vmatmul.mubr.f32.gmra.mrb[0].mxu0 %v1233
        %v1374 = vpop.f32.mrb[0].mxu0
        %v1375 = vadd.f32 %v1271, %v1374
        %v1376 = vpop.f32.mrb[0].mxu0
        %1377 = vmatprep.mubr.f32.mxu0 0.0
        %1378 = vmatmul.mubr.f32.gmra.mrb[0].mxu0 %v1235
        %v1379 = vpop.f32.mrb[0].mxu0
        %v1380 = vadd.f32 %v1271, %v1379
        %v1381 = vpop.f32.mrb[0].mxu0
        %1382 = vmatprep.mubr.f32.mxu0 0.0
        %1383 = vmatmul.mubr.f32.gmra.mrb[0].mxu0 %v1237
        %v1384 = vpop.f32.mrb[0].mxu0
        %v1385 = vadd.f32 %v1271, %v1384
        %v1386 = vpop.f32.mrb[0].mxu0
        %1387 = vmatprep.mubr.f32.mxu0 0.0
        %1388 = vmatmul.mubr.f32.gmra.mrb[0].mxu0 %v1239
        %v1389 = vpop.f32.mrb[0].mxu0
        %v1390 = vadd.f32 %v1271, %v1389
        %v1391 = vpop.f32.mrb[0].mxu0
        %1392 = vmatprep.mubr.f32.mxu0 0.0
        %1393 = vmatmul.mubr.f32.gmra.mrb[0].mxu0 %v1241
        %v1394 = vpop.f32.mrb[0].mxu0
        %v1395 = vadd.f32 %v1271, %v1394
        %v1396 = vpop.f32.mrb[0].mxu0
        %1397 = vmatprep.mubr.f32.mxu0 0.0
        %1398 = vmatmul.mubr.f32.gmra.mrb[0].mxu0 %v1243
        %v1399 = vpop.f32.mrb[0].mxu0
        %v1400 = vadd.f32 %v1271, %v1399
        %v1401 = vpop.f32.mrb[0].mxu0
        %1402 = vmatprep.mubr.f32.mxu0 0.0
        %1403 = vmatmul.mubr.f32.gmra.mrb[0].mxu0 %v1245
        %v1404 = vpop.f32.mrb[0].mxu0
        %v1405 = vadd.f32 %v1271, %v1404
        %v1406 = vpop.f32.mrb[0].mxu0
        %1407 = vmatprep.mubr.f32.mxu0 0.0
        %1408 = vmatmul.mubr.f32.gmra.mrb[0].mxu0 %v1247
        %v1409 = vpop.f32.mrb[0].mxu0
        %v1410 = vadd.f32 %v1271, %v1409
        %v1411 = vpop.f32.mrb[0].mxu0
        %1412 = vmatprep.mubr.f32.mxu0 0.0
        %1413 = vmatmul.mubr.f32.gmra.mrb[0].mxu0 %v1249
        %v1414 = vpop.f32.mrb[0].mxu0
        %v1415 = vadd.f32 %v1271, %v1414
        %v1416 = vpop.f32.mrb[0].mxu0
        %1417 = vdwg.mxu0
        %vm1418 = vcmask 23552
        %1419 = vst.msk [vmem:[%s300] sm:$0xff] %vm1418, %v1340
        %1420 = vst.msk [vmem:[%s300 + $0x8] sm:$0xff] %vm1418, %v1345
        %1421 = vst.msk [vmem:[%s300 + $0x10] sm:$0xff] %vm1418, %v1350
        %1422 = vst.msk [vmem:[%s300 + $0x18] sm:$0xff] %vm1418, %v1355
        %1423 = vst.msk [vmem:[%s300 + $0x20] sm:$0xff] %vm1418, %v1360
        %1424 = vst.msk [vmem:[%s300 + $0x28] sm:$0xff] %vm1418, %v1365
        %1425 = vst.msk [vmem:[%s300 + $0x30] sm:$0xff] %vm1418, %v1370
        %1426 = vst.msk [vmem:[%s300 + $0x38] sm:$0xff] %vm1418, %v1375
        %1427 = vst.msk [vmem:[%s300 + $0x40] sm:$0xff] %vm1418, %v1380
        %1428 = vst.msk [vmem:[%s300 + $0x48] sm:$0xff] %vm1418, %v1385
        %1429 = vst.msk [vmem:[%s300 + $0x50] sm:$0xff] %vm1418, %v1390
        %1430 = vst.msk [vmem:[%s300 + $0x58] sm:$0xff] %vm1418, %v1395
        %1431 = vst.msk [vmem:[%s300 + $0x60] sm:$0xff] %vm1418, %v1400
        %1432 = vst.msk [vmem:[%s300 + $0x68] sm:$0xff] %vm1418, %v1405
        %1433 = vst.msk [vmem:[%s300 + $0x70] sm:$0xff] %vm1418, %v1410
        %1434 = vst.msk [vmem:[%s300 + $0x78] sm:$0xff] %vm1418, %v1415
        %s1435 = smul.u32 16, %s20
        %p1436 = scmp.lt.s32.totalorder %s1435, 31
        %s1437 = scalar_select %p1436, %s1435, 31
        %s1438 = smul.addr %s1437, 8
        %s1439 = scalar_lea.vmem %s8, %s1438
        // Predicated region
        $region57: #{tpu_custom_call.1} parent=51 // pred_check
          %p1440 = pneg %p206
        $region58: #{tpu_custom_call.1} parent=51 // pred_check_branch
          %1442 = sbr.rel (%p1440) target = $region60
        $region59: #{tpu_custom_call.1} parent=51 // pred_region
          %s1443 = smul.u32 16, %s20
        $region60: #{tpu_custom_call.1} parent=51 // pred_fallthru
          _
      $region52: #{tpu_custom_call.1} parent=5 // pred_fallthru
        _
      %p1444 = scmp.le.s32.totalorder 2, %s15
      // Predicated region
      $region61: #{tpu_custom_call.1} parent=5 // pred_check
        %p1445 = pneg %p1444
      $region62: #{tpu_custom_call.1} parent=5 // pred_check_branch
        %1447 = sbr.rel (%p1445) target = $region64
      $region63: #{tpu_custom_call.1} parent=5 // pred_region
        %s1448 = ssub.s32 %s15, 2
        // Predicated region
        $region65: #{tpu_custom_call.1} parent=63 // pred_check
          %p1449 = pneg %p212
        $region66: #{tpu_custom_call.1} parent=63 // pred_check_branch
          %1451 = sbr.rel (%p1449) target = $region68
        $region67: #{tpu_custom_call.1} parent=63 // pred_region
          %s1452 = smul.u32 16, %s21
          %p1453 = scmp.lt.s32.totalorder %s1452, 31
          %s1454 = scalar_select %p1453, %s1452, 31
          %s1455 = smul.addr %s1454, 8
          %s1456 = scalar_lea.vmem %s8, %s1455
        $region68: #{tpu_custom_call.1} parent=63 // pred_fallthru
          _
      $region64: #{tpu_custom_call.1} parent=5 // pred_fallthru
        _
    $region6: #{tpu_custom_call.1} parent=1 // loop_footer
      %s19 = sadd.s32 1, %s15
    $region7: #{tpu_custom_call.1} parent=1 // loop_footer_branch
      %14 = sbr.rel target = $region3
    $region8: #{tpu_custom_call.1} parent=1 // loop_exit
      _
    %1457 = vsyncpa [#allocation3], 1
    %s1458 = scalar_lea.sflag [#allocation3], 1
    %1459 = vsyncpa %s1458, 1

</llo_original>
